<compile_context>
chip_gen: v7x
topology: tpu7x:2x2x1
jax: 0.10.0
libtpu: 0.0.40
codegen_flags: <defaults>
</compile_context>

<pallas_src>
import jax
import jax.numpy as jnp
from jax.experimental import pallas as pl
from jax.experimental.pallas import tpu as pltpu


def _round_up(x, m):
    return ((x + m - 1) // m) * m


def _vmem_budget():
    """Generation-aware VMEM limit (leave headroom for Mosaic scratch)."""
    try:
        cap = int(pltpu.get_tpu_info().vmem_capacity_bytes)
    except Exception:
        cap = 64 * 1024 * 1024
    return max(32 * 1024 * 1024, min(int(0.8 * cap), cap - 20 * 1024 * 1024))


# ---------------------------------------------------------------------------
# Fused kernel: down-proj x2 + (folded) gate + mix + SiLU + up-proj
#   grid = (token tiles [parallel], hidden-column slabs [arbitrary])
# ---------------------------------------------------------------------------
def _gate_mixer_kernel(x1_ref, x2_ref, w1_ref, b1_ref, w2_ref, b2_ref,
                       w1g_ref, w2g_ref, bg_ref, wu_ref, bu_ref,
                       o_ref, acc_ref):
    j = pl.program_id(1)

    @pl.when(j == 0)
    def _():
        acc_ref[...] = jnp.zeros_like(acc_ref)

    x1 = x1_ref[...]
    x2 = x2_ref[...]
    if x1.dtype != jnp.bfloat16:      # cast in-kernel; no extra HBM pass
        x1 = x1.astype(jnp.bfloat16)
    if x2.dtype != jnp.bfloat16:
        x2 = x2.astype(jnp.bfloat16)

    # Down projections for this column slab (bf16 MXU, f32 accumulation).
    hv1 = jnp.dot(x1, w1_ref[...], preferred_element_type=jnp.float32) + b1_ref[...]
    hv2 = jnp.dot(x2, w2_ref[...], preferred_element_type=jnp.float32) + b2_ref[...]

    # Folded gate: sigmoid(x1 @ (W1@Wg1) + x2 @ (W2@Wg2) + bg').
    g_pre = (jnp.dot(x1, w1g_ref[...], preferred_element_type=jnp.float32)
             + jnp.dot(x2, w2g_ref[...], preferred_element_type=jnp.float32)
             + bg_ref[...])
    gate = jax.nn.sigmoid(g_pre)

    # Mix: (1-g)*hv1 + g*hv2 == hv1 + g*(hv2 - hv1), then SiLU (all f32).
    hv = hv1 + gate * (hv2 - hv1)
    h = hv * jax.nn.sigmoid(hv)

    # Up-projection partial sum over this slab of rows of Wu.
    acc_ref[...] += jnp.dot(h.astype(jnp.bfloat16), wu_ref[...],
                            preferred_element_type=jnp.float32)

    @pl.when(j == pl.num_programs(1) - 1)
    def _():
        o_ref[...] = (acc_ref[...] + bu_ref[...]).astype(o_ref.dtype)


def gate_mixer_fused(x1, x2, w1, b1, w2, b2, w1g, w2g, bg, wu, bu, *,
                     tile=256, out_dtype=jnp.bfloat16):
    """x1: (T, D1), x2: (T, D2); weights bf16 stored as (in, out); biases f32 (1, F)."""
    T, D1 = x1.shape
    _, D2 = x2.shape
    M = w1.shape[1]
    H = wu.shape[1]

    # Token tile: multiple of 16 (bf16 sublane), no larger than needed.
    tile_t = _round_up(max(16, min(tile, _round_up(T, 16))), 16)
    n_t = pl.cdiv(T, tile_t)

    vmem_limit = _vmem_budget()

    # --- VMEM plan: fully-resident weights vs. streamed M-column slabs ----
    bpe_w = 2  # bf16 weights
    x_it = x1.dtype.itemsize
    o_it = jnp.dtype(out_dtype).itemsize
    act_bytes = 2 * tile_t * (D1 + D2) * x_it          # x1/x2, double-buffered
    out_bytes = 2 * tile_t * H * o_it                  # out block, double-buffered
    acc_bytes = tile_t * H * 4                         # f32 accumulator scratch
    slack = 8 * 1024 * 1024

    def plan_bytes(s, w_bufs):
        w_blk = w_bufs * bpe_w * (2 * (D1 + D2) * s + s * H)   # W1,W2,W1g,W2g,Wu slabs
        inter = 5 * tile_t * s * 4                             # hv1,hv2,gate,hv,h (f32)
        return w_blk + inter + act_bytes + out_bytes + acc_bytes

    resident = plan_bytes(M, 1) + slack <= vmem_limit
    if resident or (M % 128 != 0):
        # TODO(synk): if M is huge and not a multiple of 128, a padded slab
        # axis would be needed; here weights are kept fully resident.
        slab = M
    else:
        divs = [s for s in (1024, 512, 256, 128) if M % s == 0]
        fit = [s for s in divs if plan_bytes(s, 2) + slack <= vmem_limit]
        slab = fit[0] if fit else divs[-1]
    n_s = M // slab
    invariant = (n_s == 1)   # weight blocks constant across the whole grid

    def build(single_buffer):
        def wspec(shape, imap, inv):
            if inv and single_buffer:
                return pl.BlockSpec(shape, imap, pipeline_mode=pl.Buffered(1))
            return pl.BlockSpec(shape, imap)

        in_specs = [
            pl.BlockSpec((tile_t, D1), lambda i, j: (i, 0)),      # x1 tile
            pl.BlockSpec((tile_t, D2), lambda i, j: (i, 0)),      # x2 tile
            wspec((D1, slab), lambda i, j: (0, j), invariant),    # W1 slab
            wspec((1, slab), lambda i, j: (0, j), invariant),     # b1 slab
            wspec((D2, slab), lambda i, j: (0, j), invariant),    # W2 slab
            wspec((1, slab), lambda i, j: (0, j), invariant),     # b2 slab
            wspec((D1, slab), lambda i, j: (0, j), invariant),    # W1@Wg1 slab
            wspec((D2, slab), lambda i, j: (0, j), invariant),    # W2@Wg2 slab
            wspec((1, slab), lambda i, j: (0, j), invariant),     # folded bg slab
            wspec((slab, H), lambda i, j: (j, 0), invariant),     # Wu slab
            wspec((1, H), lambda i, j: (0, 0), True),             # bu (always invariant)
        ]
        return pl.pallas_call(
            _gate_mixer_kernel,
            out_shape=jax.ShapeDtypeStruct((T, H), out_dtype),
            grid_spec=pltpu.PrefetchScalarGridSpec(
                num_scalar_prefetch=0,
                grid=(n_t, n_s),
                in_specs=in_specs,
                out_specs=pl.BlockSpec((tile_t, H), lambda i, j: (i, 0)),
                scratch_shapes=[pltpu.VMEM((tile_t, H), jnp.float32)],
            ),
            compiler_params=pltpu.CompilerParams(
                dimension_semantics=("parallel", "arbitrary"),
                vmem_limit_bytes=vmem_limit,
            ),
        )

    args = (x1, x2, w1, b1, w2, b2, w1g, w2g, bg, wu, bu)
    try:
        return build(True)(*args)
    except Exception:
        # pipeline_mode / Buffered(1) unsupported on this jax version: fall
        # back to default double-buffering (correct, just more VMEM).
        return build(False)(*args)


# ---------------------------------------------------------------------------
# GateMixer module (parameters + forward wrapper)
# ---------------------------------------------------------------------------
class GateMixer:
    def __init__(self, hidden_size, input_v_dims=(64, 96),
                 num_register_tokens=0, key=None, tile=256,
                 out_dtype=jnp.bfloat16):
        self.mid_dim = hidden_size
        self.hidden_size = hidden_size
        self.num_register_tokens = num_register_tokens
        self.tile = tile
        self.out_dtype = out_dtype
        d1, d2 = input_v_dims
        key = jax.random.PRNGKey(0) if key is None else key
        ks = jax.random.split(key, 10)
        std = 0.02
        bf16, f32 = jnp.bfloat16, jnp.float32
        # Weights stored as (in_features, out_features) == torch weight.T,
        # in bf16 so the MXU runs at bf16 peak and weight DMA is halved.
        self.w_dn1 = (jax.random.normal(ks[0], (d1, hidden_size)) * std).astype(bf16)
        self.b_dn1 = jax.random.normal(ks[1], (1, hidden_size), f32) * std
        self.w_dn2 = (jax.random.normal(ks[2], (d2, hidden_size)) * std).astype(bf16)
        self.b_dn2 = jax.random.normal(ks[3], (1, hidden_size), f32) * std
        # gate: Linear(2*M, M); split into the hv1 half and hv2 half.
        self.w_g1 = (jax.random.normal(ks[4], (hidden_size, hidden_size)) * std).astype(bf16)
        self.w_g2 = (jax.random.normal(ks[5], (hidden_size, hidden_size)) * std).astype(bf16)
        self.b_g = jax.random.normal(ks[6], (1, hidden_size), f32) * std
        self.w_up = (jax.random.normal(ks[7], (hidden_size, hidden_size)) * std).astype(bf16)
        self.b_up = jax.random.normal(ks[8], (1, hidden_size), f32) * std

        # Fold the gate path through the down-projections (f32, then bf16):
        #   gate = sigmoid(x1 @ (W1@Wg1) + x2 @ (W2@Wg2) + (b1@Wg1+b2@Wg2+bg))
        wg1_f, wg2_f = self.w_g1.astype(f32), self.w_g2.astype(f32)
        self.w_g1_fold = (self.w_dn1.astype(f32) @ wg1_f).astype(bf16)
        self.w_g2_fold = (self.w_dn2.astype(f32) @ wg2_f).astype(bf16)
        self.b_g_fold = self.b_dn1 @ wg1_f + self.b_dn2 @ wg2_f + self.b_g

        self.register_token_embedding = None
        if num_register_tokens > 0:
            self.register_token_embedding = (
                jax.random.truncated_normal(
                    ks[9], -2.0, 2.0, (1, num_register_tokens, hidden_size),
                    f32) * 0.02)

    def __call__(self, xv):
        x1, x2 = xv                       # (B, S, D1), (B, S, D2)
        B, S, D1 = x1.shape
        _, _, D2 = x2.shape
        H = self.hidden_size

        # Fully fused Pallas kernel over the visual tokens (no pad/cast pass:
        # ragged T is handled by boundary-block masking, cast is in-kernel).
        out_tok = gate_mixer_fused(
            x1.reshape(B * S, D1), x2.reshape(B * S, D2),
            self.w_dn1, self.b_dn1, self.w_dn2, self.b_dn2,
            self.w_g1_fold, self.w_g2_fold, self.b_g_fold,
            self.w_up, self.b_up, tile=self.tile, out_dtype=self.out_dtype)
        out_tok = out_tok.reshape(B, S, H)

        if self.register_token_embedding is None:
            return out_tok

        # Register-token rows are input-independent: silu(reg) @ Wu + bu,
        # computed once in plain JAX, concatenated in front (same ordering as
        # the PyTorch module: [register tokens, visual tokens]).
        reg = self.register_token_embedding[0].astype(jnp.float32)   # (R, M)
        reg_h = reg * jax.nn.sigmoid(reg)
        reg_out = (reg_h @ self.w_up.astype(jnp.float32) + self.b_up[0])
        reg_out = reg_out.astype(out_tok.dtype)
        reg_out = jnp.broadcast_to(reg_out[None],
                                   (B, self.num_register_tokens, H))
        return jnp.concatenate([reg_out, out_tok], axis=1)

    # Pure-JAX f32 reference (unfolded math, same bf16-stored weight values).
    def reference(self, xv):
        x1, x2 = xv
        f32 = jnp.float32
        w1, w2 = self.w_dn1.astype(f32), self.w_dn2.astype(f32)
        wg1, wg2 = self.w_g1.astype(f32), self.w_g2.astype(f32)
        wu = self.w_up.astype(f32)
        hv1 = x1.astype(f32) @ w1 + self.b_dn1[0]
        hv2 = x2.astype(f32) @ w2 + self.b_dn2[0]
        gate = jax.nn.sigmoid(hv1 @ wg1 + hv2 @ wg2 + self.b_g[0])
        hv = (1.0 - gate) * hv1 + gate * hv2
        if self.register_token_embedding is not None:
            learn_embed = jnp.broadcast_to(
                self.register_token_embedding,
                (hv.shape[0], self.num_register_tokens, self.mid_dim))
            hv = jnp.concatenate([learn_embed, hv], axis=1)
        h = hv * jax.nn.sigmoid(hv)
        return h @ wu + self.b_up[0]


if __name__ == "__main__":
    key = jax.random.PRNGKey(0)
    kx1, kx2, kp = jax.random.split(key, 3)

    B, S = 2, 8
    D1, D2 = 64, 96          # small stand-ins for input_v_dims=[1024, 1536]
    hidden = 32
    n_reg = 2

    x1 = jax.random.normal(kx1, (B, S, D1), jnp.float32)
    x2 = jax.random.normal(kx2, (B, S, D2), jnp.float32)

    model = GateMixer(hidden, input_v_dims=(D1, D2),
                      num_register_tokens=n_reg, key=kp)

    out = model([x1, x2])
    out = jax.block_until_ready(out)

    ref = model.reference([x1, x2])
    assert out.shape == (B, n_reg + S, hidden), out.shape
    # bf16 matmul operands + bf16 output vs f32 reference -> loose tolerance.
    err = float(jnp.max(jnp.abs(out.astype(jnp.float32) - ref)))
    assert err < 2e-2, err

    print("KERNEL_OK")
</pallas_src>

<mosaic_0001>
module attributes {stable_mosaic.version = 11 : i64} {
  func.func @_gate_mixer_kernel(%arg0: i32, %arg1: i32, %arg2: memref<16x64xf32, #tpu.memory_space<vmem>>, %arg3: memref<16x96xf32, #tpu.memory_space<vmem>>, %arg4: memref<64x32xbf16, #tpu.memory_space<vmem>>, %arg5: memref<1x32xf32, #tpu.memory_space<vmem>>, %arg6: memref<96x32xbf16, #tpu.memory_space<vmem>>, %arg7: memref<1x32xf32, #tpu.memory_space<vmem>>, %arg8: memref<64x32xbf16, #tpu.memory_space<vmem>>, %arg9: memref<96x32xbf16, #tpu.memory_space<vmem>>, %arg10: memref<1x32xf32, #tpu.memory_space<vmem>>, %arg11: memref<32x32xbf16, #tpu.memory_space<vmem>>, %arg12: memref<1x32xf32, #tpu.memory_space<vmem>>, %arg13: memref<16x32xbf16, #tpu.memory_space<vmem>>, %arg14: memref<16x32xf32, #tpu.memory_space<vmem>>) attributes {dimension_semantics = [#tpu.dimension_semantics<parallel>, #tpu.dimension_semantics<arbitrary>], iteration_bounds = array<i64: 1, 1>, scalar_prefetch = 0 : i64, scratch_operands = 1 : i64, tpu.core_type = #tpu.core_type<tc>, window_params = [{transform_indices = @transform_0, window_bounds = array<i64: 16, 64>}, {transform_indices = @transform_1, window_bounds = array<i64: 16, 96>}, {pipeline_mode = #tpu.pipeline_mode<synchronous>, transform_indices = @transform_2, window_bounds = array<i64: 64, 32>}, {pipeline_mode = #tpu.pipeline_mode<synchronous>, transform_indices = @transform_3, window_bounds = array<i64: 1, 32>}, {pipeline_mode = #tpu.pipeline_mode<synchronous>, transform_indices = @transform_4, window_bounds = array<i64: 96, 32>}, {pipeline_mode = #tpu.pipeline_mode<synchronous>, transform_indices = @transform_5, window_bounds = array<i64: 1, 32>}, {pipeline_mode = #tpu.pipeline_mode<synchronous>, transform_indices = @transform_6, window_bounds = array<i64: 64, 32>}, {pipeline_mode = #tpu.pipeline_mode<synchronous>, transform_indices = @transform_7, window_bounds = array<i64: 96, 32>}, {pipeline_mode = #tpu.pipeline_mode<synchronous>, transform_indices = @transform_8, window_bounds = array<i64: 1, 32>}, {pipeline_mode = #tpu.pipeline_mode<synchronous>, transform_indices = @transform_9, window_bounds = array<i64: 32, 32>}, {pipeline_mode = #tpu.pipeline_mode<synchronous>, transform_indices = @transform_10, window_bounds = array<i64: 1, 32>}, {transform_indices = @transform_11, window_bounds = array<i64: 16, 32>}]} {
    %c0_i32 = arith.constant 0 : i32
    %0 = arith.cmpi eq, %arg1, %c0_i32 : i32
    %1 = arith.extui %0 : i1 to i32
    %c0_i32_0 = arith.constant 0 : i32
    %2 = arith.cmpi ne, %1, %c0_i32_0 : i32
    scf.if %2 {
      %cst_32 = arith.constant 0.000000e+00 : f32
      %48 = vector.broadcast %cst_32 : f32 to vector<16x32xf32>
      %c0_33 = arith.constant 0 : index
      %c0_34 = arith.constant 0 : index
      %49 = vector.load %arg14[%c0_33, %c0_34] : memref<16x32xf32, #tpu.memory_space<vmem>>, vector<16x32xf32>
      tpu.vector_store %arg14[%c0_33, %c0_34], %48 {strides = array<i32>} : memref<16x32xf32, #tpu.memory_space<vmem>>, vector<16x32xf32>,
    } else {
    }
    %c0 = arith.constant 0 : index
    %c0_1 = arith.constant 0 : index
    %3 = vector.load %arg2[%c0, %c0_1] : memref<16x64xf32, #tpu.memory_space<vmem>>, vector<16x64xf32>
    %c0_2 = arith.constant 0 : index
    %c0_3 = arith.constant 0 : index
    %4 = vector.load %arg3[%c0_2, %c0_3] : memref<16x96xf32, #tpu.memory_space<vmem>>, vector<16x96xf32>
    %5 = arith.truncf %3 : vector<16x64xf32> to vector<16x64xbf16>
    %6 = arith.truncf %4 : vector<16x96xf32> to vector<16x96xbf16>
    %c0_4 = arith.constant 0 : index
    %c0_5 = arith.constant 0 : index
    %7 = vector.load %arg4[%c0_4, %c0_5] : memref<64x32xbf16, #tpu.memory_space<vmem>>, vector<64x32xbf16>
    %cst = arith.constant dense<0.000000e+00> : vector<16x32xf32>
    %8 = tpu.matmul %5, %7, %cst {dimension_numbers = #tpu.dot_dimension_numbers<[1], [0], [0], [1], [0, 0, 1, 1], [], []>} : vector<16x64xbf16>, vector<64x32xbf16>, vector<16x32xf32> -> vector<16x32xf32>
    %c0_6 = arith.constant 0 : index
    %c0_7 = arith.constant 0 : index
    %9 = vector.load %arg5[%c0_6, %c0_7] : memref<1x32xf32, #tpu.memory_space<vmem>>, vector<1x32xf32>
    %10 = vector.broadcast %9 : vector<1x32xf32> to vector<16x32xf32>
    %11 = arith.addf %8, %10 : vector<16x32xf32>
    %c0_8 = arith.constant 0 : index
    %c0_9 = arith.constant 0 : index
    %12 = vector.load %arg6[%c0_8, %c0_9] : memref<96x32xbf16, #tpu.memory_space<vmem>>, vector<96x32xbf16>
    %cst_10 = arith.constant dense<0.000000e+00> : vector<16x32xf32>
    %13 = tpu.matmul %6, %12, %cst_10 {dimension_numbers = #tpu.dot_dimension_numbers<[1], [0], [0], [1], [0, 0, 1, 1], [], []>} : vector<16x96xbf16>, vector<96x32xbf16>, vector<16x32xf32> -> vector<16x32xf32>
    %c0_11 = arith.constant 0 : index
    %c0_12 = arith.constant 0 : index
    %14 = vector.load %arg7[%c0_11, %c0_12] : memref<1x32xf32, #tpu.memory_space<vmem>>, vector<1x32xf32>
    %15 = vector.broadcast %14 : vector<1x32xf32> to vector<16x32xf32>
    %16 = arith.addf %13, %15 : vector<16x32xf32>
    %c0_13 = arith.constant 0 : index
    %c0_14 = arith.constant 0 : index
    %17 = vector.load %arg8[%c0_13, %c0_14] : memref<64x32xbf16, #tpu.memory_space<vmem>>, vector<64x32xbf16>
    %cst_15 = arith.constant dense<0.000000e+00> : vector<16x32xf32>
    %18 = tpu.matmul %5, %17, %cst_15 {dimension_numbers = #tpu.dot_dimension_numbers<[1], [0], [0], [1], [0, 0, 1, 1], [], []>} : vector<16x64xbf16>, vector<64x32xbf16>, vector<16x32xf32> -> vector<16x32xf32>
    %c0_16 = arith.constant 0 : index
    %c0_17 = arith.constant 0 : index
    %19 = vector.load %arg9[%c0_16, %c0_17] : memref<96x32xbf16, #tpu.memory_space<vmem>>, vector<96x32xbf16>
    %cst_18 = arith.constant dense<0.000000e+00> : vector<16x32xf32>
    %20 = tpu.matmul %6, %19, %cst_18 {dimension_numbers = #tpu.dot_dimension_numbers<[1], [0], [0], [1], [0, 0, 1, 1], [], []>} : vector<16x96xbf16>, vector<96x32xbf16>, vector<16x32xf32> -> vector<16x32xf32>
    %21 = arith.addf %18, %20 : vector<16x32xf32>
    %c0_19 = arith.constant 0 : index
    %c0_20 = arith.constant 0 : index
    %22 = vector.load %arg10[%c0_19, %c0_20] : memref<1x32xf32, #tpu.memory_space<vmem>>, vector<1x32xf32>
    %23 = vector.broadcast %22 : vector<1x32xf32> to vector<16x32xf32>
    %24 = arith.addf %21, %23 : vector<16x32xf32>
    %25 = arith.negf %24 : vector<16x32xf32>
    %26 = math.exp %25 : vector<16x32xf32>
    %cst_21 = arith.constant 1.000000e+00 : f32
    %27 = vector.broadcast %cst_21 : f32 to vector<16x32xf32>
    %28 = arith.addf %27, %26 : vector<16x32xf32>
    %29 = arith.divf %27, %28 : vector<16x32xf32>
    %30 = arith.subf %16, %11 : vector<16x32xf32>
    %31 = arith.mulf %29, %30 : vector<16x32xf32>
    %32 = arith.addf %11, %31 : vector<16x32xf32>
    %33 = arith.negf %32 : vector<16x32xf32>
    %34 = math.exp %33 : vector<16x32xf32>
    %cst_22 = arith.constant 1.000000e+00 : f32
    %35 = vector.broadcast %cst_22 : f32 to vector<16x32xf32>
    %36 = arith.addf %35, %34 : vector<16x32xf32>
    %37 = arith.divf %35, %36 : vector<16x32xf32>
    %38 = arith.mulf %32, %37 : vector<16x32xf32>
    %c0_23 = arith.constant 0 : index
    %c0_24 = arith.constant 0 : index
    %39 = vector.load %arg14[%c0_23, %c0_24] : memref<16x32xf32, #tpu.memory_space<vmem>>, vector<16x32xf32>
    %40 = arith.truncf %38 : vector<16x32xf32> to vector<16x32xbf16>
    %c0_25 = arith.constant 0 : index
    %c0_26 = arith.constant 0 : index
    %41 = vector.load %arg11[%c0_25, %c0_26] : memref<32x32xbf16, #tpu.memory_space<vmem>>, vector<32x32xbf16>
    %cst_27 = arith.constant dense<0.000000e+00> : vector<16x32xf32>
    %42 = tpu.matmul %40, %41, %cst_27 {dimension_numbers = #tpu.dot_dimension_numbers<[1], [0], [0], [1], [0, 0, 1, 1], [], []>} : vector<16x32xbf16>, vector<32x32xbf16>, vector<16x32xf32> -> vector<16x32xf32>
    %43 = arith.addf %39, %42 : vector<16x32xf32>
    %c0_28 = arith.constant 0 : index
    %c0_29 = arith.constant 0 : index
    %44 = vector.load %arg14[%c0_28, %c0_29] : memref<16x32xf32, #tpu.memory_space<vmem>>, vector<16x32xf32>
    tpu.vector_store %arg14[%c0_28, %c0_29], %43 {strides = array<i32>} : memref<16x32xf32, #tpu.memory_space<vmem>>, vector<16x32xf32>,
    %c0_i32_30 = arith.constant 0 : i32
    %45 = arith.cmpi eq, %arg1, %c0_i32_30 : i32
    %46 = arith.extui %45 : i1 to i32
    %c0_i32_31 = arith.constant 0 : i32
    %47 = arith.cmpi ne, %46, %c0_i32_31 : i32
    scf.if %47 {
      %c0_32 = arith.constant 0 : index
      %c0_33 = arith.constant 0 : index
      %48 = vector.load %arg14[%c0_32, %c0_33] : memref<16x32xf32, #tpu.memory_space<vmem>>, vector<16x32xf32>
      %c0_34 = arith.constant 0 : index
      %c0_35 = arith.constant 0 : index
      %49 = vector.load %arg12[%c0_34, %c0_35] : memref<1x32xf32, #tpu.memory_space<vmem>>, vector<1x32xf32>
      %50 = vector.broadcast %49 : vector<1x32xf32> to vector<16x32xf32>
      %51 = arith.addf %48, %50 : vector<16x32xf32>
      %52 = arith.truncf %51 : vector<16x32xf32> to vector<16x32xbf16>
      %c0_36 = arith.constant 0 : index
      %c0_37 = arith.constant 0 : index
      %53 = vector.load %arg13[%c0_36, %c0_37] : memref<16x32xbf16, #tpu.memory_space<vmem>>, vector<16x32xbf16>
      tpu.vector_store %arg13[%c0_36, %c0_37], %52 {strides = array<i32>} : memref<16x32xbf16, #tpu.memory_space<vmem>>, vector<16x32xbf16>,
    } else {
    }
    return
  }
  func.func @transform_0(%arg0: i32, %arg1: i32) -> (i32, i32) {
    %c0_i32 = arith.constant 0 : i32
    %c0_i32_0 = arith.constant 0 : i32
    return %arg0, %c0_i32 : i32, i32
  }
  func.func @transform_1(%arg0: i32, %arg1: i32) -> (i32, i32) {
    %c0_i32 = arith.constant 0 : i32
    %c0_i32_0 = arith.constant 0 : i32
    return %arg0, %c0_i32 : i32, i32
  }
  func.func @transform_2(%arg0: i32, %arg1: i32) -> (i32, i32) {
    %c0_i32 = arith.constant 0 : i32
    %c0_i32_0 = arith.constant 0 : i32
    return %c0_i32, %arg1 : i32, i32
  }
  func.func @transform_3(%arg0: i32, %arg1: i32) -> (i32, i32) {
    %c0_i32 = arith.constant 0 : i32
    %c0_i32_0 = arith.constant 0 : i32
    return %c0_i32, %arg1 : i32, i32
  }
  func.func @transform_4(%arg0: i32, %arg1: i32) -> (i32, i32) {
    %c0_i32 = arith.constant 0 : i32
    %c0_i32_0 = arith.constant 0 : i32
    return %c0_i32, %arg1 : i32, i32
  }
  func.func @transform_5(%arg0: i32, %arg1: i32) -> (i32, i32) {
    %c0_i32 = arith.constant 0 : i32
    %c0_i32_0 = arith.constant 0 : i32
    return %c0_i32, %arg1 : i32, i32
  }
  func.func @transform_6(%arg0: i32, %arg1: i32) -> (i32, i32) {
    %c0_i32 = arith.constant 0 : i32
    %c0_i32_0 = arith.constant 0 : i32
    return %c0_i32, %arg1 : i32, i32
  }
  func.func @transform_7(%arg0: i32, %arg1: i32) -> (i32, i32) {
    %c0_i32 = arith.constant 0 : i32
    %c0_i32_0 = arith.constant 0 : i32
    return %c0_i32, %arg1 : i32, i32
  }
  func.func @transform_8(%arg0: i32, %arg1: i32) -> (i32, i32) {
    %c0_i32 = arith.constant 0 : i32
    %c0_i32_0 = arith.constant 0 : i32
    return %c0_i32, %arg1 : i32, i32
  }
  func.func @transform_9(%arg0: i32, %arg1: i32) -> (i32, i32) {
    %c0_i32 = arith.constant 0 : i32
    %c0_i32_0 = arith.constant 0 : i32
    return %arg1, %c0_i32 : i32, i32
  }
  func.func @transform_10(%arg0: i32, %arg1: i32) -> (i32, i32) {
    %c0_i32 = arith.constant 0 : i32
    %c0_i32_0 = arith.constant 0 : i32
    %c0_i32_1 = arith.constant 0 : i32
    return %c0_i32, %c0_i32_0 : i32, i32
  }
  func.func @transform_11(%arg0: i32, %arg1: i32) -> (i32, i32) {
    %c0_i32 = arith.constant 0 : i32
    %c0_i32_0 = arith.constant 0 : i32
    return %arg0, %c0_i32 : i32, i32
  }
}

module attributes {stable_mosaic.version = 11 : i64} {
  func.func @_gate_mixer_kernel(%arg0: i32, %arg1: i32, %arg2: memref<16x64xf32, #tpu.memory_space<vmem>>, %arg3: memref<16x96xf32, #tpu.memory_space<vmem>>, %arg4: memref<64x32xbf16, #tpu.memory_space<vmem>>, %arg5: memref<1x32xf32, #tpu.memory_space<vmem>>, %arg6: memref<96x32xbf16, #tpu.memory_space<vmem>>, %arg7: memref<1x32xf32, #tpu.memory_space<vmem>>, %arg8: memref<64x32xbf16, #tpu.memory_space<vmem>>, %arg9: memref<96x32xbf16, #tpu.memory_space<vmem>>, %arg10: memref<1x32xf32, #tpu.memory_space<vmem>>, %arg11: memref<32x32xbf16, #tpu.memory_space<vmem>>, %arg12: memref<1x32xf32, #tpu.memory_space<vmem>>, %arg13: memref<16x32xbf16, #tpu.memory_space<vmem>>, %arg14: memref<16x32xf32, #tpu.memory_space<vmem>>) attributes {dimension_semantics = [#tpu.dimension_semantics<parallel>, #tpu.dimension_semantics<arbitrary>], iteration_bounds = array<i64: 1, 1>, scalar_prefetch = 0 : i64, scratch_operands = 1 : i64, tpu.core_type = #tpu.core_type<tc>, window_params = [{transform_indices = @transform_0, window_bounds = array<i64: 16, 64>}, {transform_indices = @transform_1, window_bounds = array<i64: 16, 96>}, {transform_indices = @transform_2, window_bounds = array<i64: 64, 32>}, {transform_indices = @transform_3, window_bounds = array<i64: 1, 32>}, {transform_indices = @transform_4, window_bounds = array<i64: 96, 32>}, {transform_indices = @transform_5, window_bounds = array<i64: 1, 32>}, {transform_indices = @transform_6, window_bounds = array<i64: 64, 32>}, {transform_indices = @transform_7, window_bounds = array<i64: 96, 32>}, {transform_indices = @transform_8, window_bounds = array<i64: 1, 32>}, {transform_indices = @transform_9, window_bounds = array<i64: 32, 32>}, {pipeline_mode = #tpu.pipeline_mode<synchronous>, transform_indices = @transform_10, window_bounds = array<i64: 1, 32>}, {transform_indices = @transform_11, window_bounds = array<i64: 16, 32>}]} {
    %c0_i32 = arith.constant 0 : i32
    %0 = arith.cmpi eq, %arg1, %c0_i32 : i32
    %1 = arith.extui %0 : i1 to i32
    %c0_i32_0 = arith.constant 0 : i32
    %2 = arith.cmpi ne, %1, %c0_i32_0 : i32
    scf.if %2 {
      %cst_32 = arith.constant 0.000000e+00 : f32
      %48 = vector.broadcast %cst_32 : f32 to vector<16x32xf32>
      %c0_33 = arith.constant 0 : index
      %c0_34 = arith.constant 0 : index
      %49 = vector.load %arg14[%c0_33, %c0_34] : memref<16x32xf32, #tpu.memory_space<vmem>>, vector<16x32xf32>
      tpu.vector_store %arg14[%c0_33, %c0_34], %48 {strides = array<i32>} : memref<16x32xf32, #tpu.memory_space<vmem>>, vector<16x32xf32>,
    } else {
    }
    %c0 = arith.constant 0 : index
    %c0_1 = arith.constant 0 : index
    %3 = vector.load %arg2[%c0, %c0_1] : memref<16x64xf32, #tpu.memory_space<vmem>>, vector<16x64xf32>
    %c0_2 = arith.constant 0 : index
    %c0_3 = arith.constant 0 : index
    %4 = vector.load %arg3[%c0_2, %c0_3] : memref<16x96xf32, #tpu.memory_space<vmem>>, vector<16x96xf32>
    %5 = arith.truncf %3 : vector<16x64xf32> to vector<16x64xbf16>
    %6 = arith.truncf %4 : vector<16x96xf32> to vector<16x96xbf16>
    %c0_4 = arith.constant 0 : index
    %c0_5 = arith.constant 0 : index
    %7 = vector.load %arg4[%c0_4, %c0_5] : memref<64x32xbf16, #tpu.memory_space<vmem>>, vector<64x32xbf16>
    %cst = arith.constant dense<0.000000e+00> : vector<16x32xf32>
    %8 = tpu.matmul %5, %7, %cst {dimension_numbers = #tpu.dot_dimension_numbers<[1], [0], [0], [1], [0, 0, 1, 1], [], []>} : vector<16x64xbf16>, vector<64x32xbf16>, vector<16x32xf32> -> vector<16x32xf32>
    %c0_6 = arith.constant 0 : index
    %c0_7 = arith.constant 0 : index
    %9 = vector.load %arg5[%c0_6, %c0_7] : memref<1x32xf32, #tpu.memory_space<vmem>>, vector<1x32xf32>
    %10 = vector.broadcast %9 : vector<1x32xf32> to vector<16x32xf32>
    %11 = arith.addf %8, %10 : vector<16x32xf32>
    %c0_8 = arith.constant 0 : index
    %c0_9 = arith.constant 0 : index
    %12 = vector.load %arg6[%c0_8, %c0_9] : memref<96x32xbf16, #tpu.memory_space<vmem>>, vector<96x32xbf16>
    %cst_10 = arith.constant dense<0.000000e+00> : vector<16x32xf32>
    %13 = tpu.matmul %6, %12, %cst_10 {dimension_numbers = #tpu.dot_dimension_numbers<[1], [0], [0], [1], [0, 0, 1, 1], [], []>} : vector<16x96xbf16>, vector<96x32xbf16>, vector<16x32xf32> -> vector<16x32xf32>
    %c0_11 = arith.constant 0 : index
    %c0_12 = arith.constant 0 : index
    %14 = vector.load %arg7[%c0_11, %c0_12] : memref<1x32xf32, #tpu.memory_space<vmem>>, vector<1x32xf32>
    %15 = vector.broadcast %14 : vector<1x32xf32> to vector<16x32xf32>
    %16 = arith.addf %13, %15 : vector<16x32xf32>
    %c0_13 = arith.constant 0 : index
    %c0_14 = arith.constant 0 : index
    %17 = vector.load %arg8[%c0_13, %c0_14] : memref<64x32xbf16, #tpu.memory_space<vmem>>, vector<64x32xbf16>
    %cst_15 = arith.constant dense<0.000000e+00> : vector<16x32xf32>
    %18 = tpu.matmul %5, %17, %cst_15 {dimension_numbers = #tpu.dot_dimension_numbers<[1], [0], [0], [1], [0, 0, 1, 1], [], []>} : vector<16x64xbf16>, vector<64x32xbf16>, vector<16x32xf32> -> vector<16x32xf32>
    %c0_16 = arith.constant 0 : index
    %c0_17 = arith.constant 0 : index
    %19 = vector.load %arg9[%c0_16, %c0_17] : memref<96x32xbf16, #tpu.memory_space<vmem>>, vector<96x32xbf16>
    %cst_18 = arith.constant dense<0.000000e+00> : vector<16x32xf32>
    %20 = tpu.matmul %6, %19, %cst_18 {dimension_numbers = #tpu.dot_dimension_numbers<[1], [0], [0], [1], [0, 0, 1, 1], [], []>} : vector<16x96xbf16>, vector<96x32xbf16>, vector<16x32xf32> -> vector<16x32xf32>
    %21 = arith.addf %18, %20 : vector<16x32xf32>
    %c0_19 = arith.constant 0 : index
    %c0_20 = arith.constant 0 : index
    %22 = vector.load %arg10[%c0_19, %c0_20] : memref<1x32xf32, #tpu.memory_space<vmem>>, vector<1x32xf32>
    %23 = vector.broadcast %22 : vector<1x32xf32> to vector<16x32xf32>
    %24 = arith.addf %21, %23 : vector<16x32xf32>
    %25 = arith.negf %24 : vector<16x32xf32>
    %26 = math.exp %25 : vector<16x32xf32>
    %cst_21 = arith.constant 1.000000e+00 : f32
    %27 = vector.broadcast %cst_21 : f32 to vector<16x32xf32>
    %28 = arith.addf %27, %26 : vector<16x32xf32>
    %29 = arith.divf %27, %28 : vector<16x32xf32>
    %30 = arith.subf %16, %11 : vector<16x32xf32>
    %31 = arith.mulf %29, %30 : vector<16x32xf32>
    %32 = arith.addf %11, %31 : vector<16x32xf32>
    %33 = arith.negf %32 : vector<16x32xf32>
    %34 = math.exp %33 : vector<16x32xf32>
    %cst_22 = arith.constant 1.000000e+00 : f32
    %35 = vector.broadcast %cst_22 : f32 to vector<16x32xf32>
    %36 = arith.addf %35, %34 : vector<16x32xf32>
    %37 = arith.divf %35, %36 : vector<16x32xf32>
    %38 = arith.mulf %32, %37 : vector<16x32xf32>
    %c0_23 = arith.constant 0 : index
    %c0_24 = arith.constant 0 : index
    %39 = vector.load %arg14[%c0_23, %c0_24] : memref<16x32xf32, #tpu.memory_space<vmem>>, vector<16x32xf32>
    %40 = arith.truncf %38 : vector<16x32xf32> to vector<16x32xbf16>
    %c0_25 = arith.constant 0 : index
    %c0_26 = arith.constant 0 : index
    %41 = vector.load %arg11[%c0_25, %c0_26] : memref<32x32xbf16, #tpu.memory_space<vmem>>, vector<32x32xbf16>
    %cst_27 = arith.constant dense<0.000000e+00> : vector<16x32xf32>
    %42 = tpu.matmul %40, %41, %cst_27 {dimension_numbers = #tpu.dot_dimension_numbers<[1], [0], [0], [1], [0, 0, 1, 1], [], []>} : vector<16x32xbf16>, vector<32x32xbf16>, vector<16x32xf32> -> vector<16x32xf32>
    %43 = arith.addf %39, %42 : vector<16x32xf32>
    %c0_28 = arith.constant 0 : index
    %c0_29 = arith.constant 0 : index
    %44 = vector.load %arg14[%c0_28, %c0_29] : memref<16x32xf32, #tpu.memory_space<vmem>>, vector<16x32xf32>
    tpu.vector_store %arg14[%c0_28, %c0_29], %43 {strides = array<i32>} : memref<16x32xf32, #tpu.memory_space<vmem>>, vector<16x32xf32>,
    %c0_i32_30 = arith.constant 0 : i32
    %45 = arith.cmpi eq, %arg1, %c0_i32_30 : i32
    %46 = arith.extui %45 : i1 to i32
    %c0_i32_31 = arith.constant 0 : i32
    %47 = arith.cmpi ne, %46, %c0_i32_31 : i32
    scf.if %47 {
      %c0_32 = arith.constant 0 : index
      %c0_33 = arith.constant 0 : index
      %48 = vector.load %arg14[%c0_32, %c0_33] : memref<16x32xf32, #tpu.memory_space<vmem>>, vector<16x32xf32>
      %c0_34 = arith.constant 0 : index
      %c0_35 = arith.constant 0 : index
      %49 = vector.load %arg12[%c0_34, %c0_35] : memref<1x32xf32, #tpu.memory_space<vmem>>, vector<1x32xf32>
      %50 = vector.broadcast %49 : vector<1x32xf32> to vector<16x32xf32>
      %51 = arith.addf %48, %50 : vector<16x32xf32>
      %52 = arith.truncf %51 : vector<16x32xf32> to vector<16x32xbf16>
      %c0_36 = arith.constant 0 : index
      %c0_37 = arith.constant 0 : index
      %53 = vector.load %arg13[%c0_36, %c0_37] : memref<16x32xbf16, #tpu.memory_space<vmem>>, vector<16x32xbf16>
      tpu.vector_store %arg13[%c0_36, %c0_37], %52 {strides = array<i32>} : memref<16x32xbf16, #tpu.memory_space<vmem>>, vector<16x32xbf16>,
    } else {
    }
    return
  }
  func.func @transform_0(%arg0: i32, %arg1: i32) -> (i32, i32) {
    %c0_i32 = arith.constant 0 : i32
    %c0_i32_0 = arith.constant 0 : i32
    return %arg0, %c0_i32 : i32, i32
  }
  func.func @transform_1(%arg0: i32, %arg1: i32) -> (i32, i32) {
    %c0_i32 = arith.constant 0 : i32
    %c0_i32_0 = arith.constant 0 : i32
    return %arg0, %c0_i32 : i32, i32
  }
  func.func @transform_2(%arg0: i32, %arg1: i32) -> (i32, i32) {
    %c0_i32 = arith.constant 0 : i32
    %c0_i32_0 = arith.constant 0 : i32
    return %c0_i32, %arg1 : i32, i32
  }
  func.func @transform_3(%arg0: i32, %arg1: i32) -> (i32, i32) {
    %c0_i32 = arith.constant 0 : i32
    %c0_i32_0 = arith.constant 0 : i32
    return %c0_i32, %arg1 : i32, i32
  }
  func.func @transform_4(%arg0: i32, %arg1: i32) -> (i32, i32) {
    %c0_i32 = arith.constant 0 : i32
    %c0_i32_0 = arith.constant 0 : i32
    return %c0_i32, %arg1 : i32, i32
  }
  func.func @transform_5(%arg0: i32, %arg1: i32) -> (i32, i32) {
    %c0_i32 = arith.constant 0 : i32
    %c0_i32_0 = arith.constant 0 : i32
    return %c0_i32, %arg1 : i32, i32
  }
  func.func @transform_6(%arg0: i32, %arg1: i32) -> (i32, i32) {
    %c0_i32 = arith.constant 0 : i32
    %c0_i32_0 = arith.constant 0 : i32
    return %c0_i32, %arg1 : i32, i32
  }
  func.func @transform_7(%arg0: i32, %arg1: i32) -> (i32, i32) {
    %c0_i32 = arith.constant 0 : i32
    %c0_i32_0 = arith.constant 0 : i32
    return %c0_i32, %arg1 : i32, i32
  }
  func.func @transform_8(%arg0: i32, %arg1: i32) -> (i32, i32) {
    %c0_i32 = arith.constant 0 : i32
    %c0_i32_0 = arith.constant 0 : i32
    return %c0_i32, %arg1 : i32, i32
  }
  func.func @transform_9(%arg0: i32, %arg1: i32) -> (i32, i32) {
    %c0_i32 = arith.constant 0 : i32
    %c0_i32_0 = arith.constant 0 : i32
    return %arg1, %c0_i32 : i32, i32
  }
  func.func @transform_10(%arg0: i32, %arg1: i32) -> (i32, i32) {
    %c0_i32 = arith.constant 0 : i32
    %c0_i32_0 = arith.constant 0 : i32
    %c0_i32_1 = arith.constant 0 : i32
    return %c0_i32, %c0_i32_0 : i32, i32
  }
  func.func @transform_11(%arg0: i32, %arg1: i32) -> (i32, i32) {
    %c0_i32 = arith.constant 0 : i32
    %c0_i32_0 = arith.constant 0 : i32
    return %arg0, %c0_i32 : i32, i32
  }
}

</mosaic_0001>

<llo_original>
// kernel: tpu_custom_call.1
$region0: #{tpu_custom_call.1}
  #allocation0 [shape = 'u32[]', space=smem, size = 0x4, offset = 0x4, fixed_abs, tag = 'smem constant byte address 0x4 - core index']
  #allocation1 [shape = 'u32[144,128]{1,0:T(1,128)}', space=vmem, size = 0x12000, scoped, tag = 'internal scratch']
  #allocation2 [shape = 'f32[16,32]{1,0:T(8,128)}', space=vmem, size = 0x2000, scoped, tag = 'scratch operand']
  %s0 = inlined_call_operand.vmem [shape: f32[16,64], index: 0, kind: input, shape index: {}]
  %s1 = inlined_call_operand.vmem [shape: f32[16,96], index: 1, kind: input, shape index: {}]
  %s2 = inlined_call_operand.vmem [shape: bf16[64,32], index: 2, kind: input, shape index: {}]
  %s3 = inlined_call_operand.vmem [shape: f32[1,32], index: 3, kind: input, shape index: {}]
  %s4 = inlined_call_operand.vmem [shape: bf16[96,32], index: 4, kind: input, shape index: {}]
  %s5 = inlined_call_operand.vmem [shape: f32[1,32], index: 5, kind: input, shape index: {}]
  %s6 = inlined_call_operand.vmem [shape: bf16[64,32], index: 6, kind: input, shape index: {}]
  %s7 = inlined_call_operand.vmem [shape: bf16[96,32], index: 7, kind: input, shape index: {}]
  %s8 = inlined_call_operand.vmem [shape: f32[1,32], index: 8, kind: input, shape index: {}]
  %s9 = inlined_call_operand.vmem [shape: bf16[32,32], index: 9, kind: input, shape index: {}]
  %s10 = inlined_call_operand.vmem [shape: f32[1,32], index: 10, kind: input, shape index: {}]
  %s11 = inlined_call_operand.hbm [shape: bf16[16,32], index: 11, kind: output, shape index: {}]
  %s12 = sld [smem:[#allocation0]]
  $region62: #{tpu_custom_call.1} parent=0
    _
  %s14 = ssub.s32 1, %s12
  %s15 = scalar_select 0, %s14, %s12
  $region1: #{tpu_custom_call.1} parent=0
    #allocation3 [shape = 'u8[4096]{0}', space=vmem, size = 0x1000, scoped, tag = 'output window, operand 0, single buffered']
    #allocation4 [shape = 's32[1]{0}', space=sflag, size = 0x4, scoped, tag = 'scoped memory for tpu_custom_call.1']
    %16 = vsyncpa [#allocation4], 0
    // Predicated region
    $region2: #{tpu_custom_call.1} parent=1 // pred_check
      _
    $region3: #{tpu_custom_call.1} parent=1 // pred_check_branch
      %18 = sbr.rel (0) target = $region5
    $region4: #{tpu_custom_call.1} parent=1 // pred_region
      _
    $region5: #{tpu_custom_call.1} parent=1 // pred_fallthru
      _
    // Predicated region
    $region6: #{tpu_custom_call.1} parent=1 // pred_check
      _
    $region7: #{tpu_custom_call.1} parent=1 // pred_check_branch
      %20 = sbr.rel (0) target = $region9
    $region8: #{tpu_custom_call.1} parent=1 // pred_region
      _
    $region9: #{tpu_custom_call.1} parent=1 // pred_fallthru
      _
    // Predicated region
    $region10: #{tpu_custom_call.1} parent=1 // pred_check
      _
    $region11: #{tpu_custom_call.1} parent=1 // pred_check_branch
      %22 = sbr.rel (0) target = $region13
    $region12: #{tpu_custom_call.1} parent=1 // pred_region
      _
    $region13: #{tpu_custom_call.1} parent=1 // pred_fallthru
      _
    // Predicated region
    $region14: #{tpu_custom_call.1} parent=1 // pred_check
      _
    $region15: #{tpu_custom_call.1} parent=1 // pred_check_branch
      %24 = sbr.rel (0) target = $region17
    $region16: #{tpu_custom_call.1} parent=1 // pred_region
      _
    $region17: #{tpu_custom_call.1} parent=1 // pred_fallthru
      _
    // Predicated region
    $region18: #{tpu_custom_call.1} parent=1 // pred_check
      _
    $region19: #{tpu_custom_call.1} parent=1 // pred_check_branch
      %26 = sbr.rel (0) target = $region21
    $region20: #{tpu_custom_call.1} parent=1 // pred_region
      _
    $region21: #{tpu_custom_call.1} parent=1 // pred_fallthru
      _
    // Predicated region
    $region22: #{tpu_custom_call.1} parent=1 // pred_check
      _
    $region23: #{tpu_custom_call.1} parent=1 // pred_check_branch
      %28 = sbr.rel (0) target = $region25
    $region24: #{tpu_custom_call.1} parent=1 // pred_region
      _
    $region25: #{tpu_custom_call.1} parent=1 // pred_fallthru
      _
    // Predicated region
    $region26: #{tpu_custom_call.1} parent=1 // pred_check
      _
    $region27: #{tpu_custom_call.1} parent=1 // pred_check_branch
      %30 = sbr.rel (0) target = $region29
    $region28: #{tpu_custom_call.1} parent=1 // pred_region
      _
    $region29: #{tpu_custom_call.1} parent=1 // pred_fallthru
      _
    // Predicated region
    $region30: #{tpu_custom_call.1} parent=1 // pred_check
      _
    $region31: #{tpu_custom_call.1} parent=1 // pred_check_branch
      %32 = sbr.rel (0) target = $region33
    $region32: #{tpu_custom_call.1} parent=1 // pred_region
      _
    $region33: #{tpu_custom_call.1} parent=1 // pred_fallthru
      _
    // Predicated region
    $region34: #{tpu_custom_call.1} parent=1 // pred_check
      _
    $region35: #{tpu_custom_call.1} parent=1 // pred_check_branch
      %34 = sbr.rel (0) target = $region37
    $region36: #{tpu_custom_call.1} parent=1 // pred_region
      _
    $region37: #{tpu_custom_call.1} parent=1 // pred_fallthru
      _
    // Predicated region
    $region38: #{tpu_custom_call.1} parent=1 // pred_check
      _
    $region39: #{tpu_custom_call.1} parent=1 // pred_check_branch
      %36 = sbr.rel (0) target = $region41
    $region40: #{tpu_custom_call.1} parent=1 // pred_region
      _
    $region41: #{tpu_custom_call.1} parent=1 // pred_fallthru
      _
    // Predicated region
    $region42: #{tpu_custom_call.1} parent=1 // pred_check
      _
    $region43: #{tpu_custom_call.1} parent=1 // pred_check_branch
      %38 = sbr.rel (0) target = $region45
    $region44: #{tpu_custom_call.1} parent=1 // pred_region
      _
    $region45: #{tpu_custom_call.1} parent=1 // pred_fallthru
      _
    %p40 = scmp.eq.s32.totalorder 0, 0
    // Predicated region
    $region46: #{tpu_custom_call.1} parent=1 // pred_check
      %p41 = pneg %p40
    $region47: #{tpu_custom_call.1} parent=1 // pred_check_branch
      %43 = sbr.rel (%p41) target = $region49
    $region48: #{tpu_custom_call.1} parent=1 // pred_region
      %vm44 = vcmask 261120
      %45 = vst.msk [vmem:[#allocation2] sm:$0xff] %vm44, 0.0
      %46 = vst.msk [vmem:[#allocation2 + $0x8] sm:$0xff] %vm44, 0.0
    $region49: #{tpu_custom_call.1} parent=1 // pred_fallthru
      _
    %v47 = vld [vmem:[%s0] sm:$0xff]
    %v48 = vld [vmem:[%s0 + $0x8] sm:$0xff]
    %v49 = vld [vmem:[%s1] sm:$0xff]
    %v50 = vld [vmem:[%s1 + $0x8] sm:$0xff]
    %v51 = vpack.c.bf16 %v48, %v47
    %v52 = vpack.c.bf16 %v50, %v49
    %v53 = vld [vmem:[%s2] sm:$0xf]
    %v54 = vld [vmem:[%s2 + $0x4] sm:$0xf]
    %v55 = vld [vmem:[%s2 + $0x8] sm:$0xf]
    %v56 = vld [vmem:[%s2 + $0xc] sm:$0xf]
    %v57 = vld [vmem:[%s2 + $0x10] sm:$0xf]
    %v58 = vld [vmem:[%s2 + $0x14] sm:$0xf]
    %v59 = vld [vmem:[%s2 + $0x18] sm:$0xf]
    %v60 = vld [vmem:[%s2 + $0x1c] sm:$0xf]
    %v61 = vld [vmem:[%s3] sm:$0x1]
    %v63 = vlaneseq
    %v64 = vshrl.u32 %v63, 7
    %v65 = vsub.s32 0, %v64
    %v66 = vrot.slane %v61, %v65
    %v76 = vunpack.c.l.b16 %v53
    %v77 = vunpack.c.l.b16 %v54
    %v78 = vunpack.c.l.b16 %v55
    %v79 = vunpack.c.l.b16 %v56
    %v80 = vunpack.c.l.b16 %v57
    %v81 = vunpack.c.l.b16 %v58
    %v82 = vunpack.c.l.b16 %v59
    %v83 = vunpack.c.l.b16 %v60
    %v84 = vpack.c.b16 %v77, %v76
    %v85 = vpack.c.b16 %v79, %v78
    %v86 = vpack.c.b16 %v81, %v80
    %v87 = vpack.c.b16 %v83, %v82
    %vm92 = vcmask 523264
    %v94 = vsel %vm92, %v51, 0
    %96 = vmatprep.subr.bf16.mxu0 0
    %97 = vmatpush1.bf16.msra.mxu0 %v84
    %98 = vmatprep.subr.bf16.mxu0 0
    %99 = vmatpush1.bf16.msra.mxu0 %v85
    %100 = vmatprep.subr.bf16.mxu0 0
    %101 = vmatpush1.bf16.msra.mxu0 %v86
    %102 = vmatprep.subr.bf16.mxu0 0
    %103 = vmatpush1.bf16.msra.mxu0 %v87
    %104 = vmatprep.subr.bf16.mxu0 0
    %105 = vmatpush1.bf16.msra.mxu0 0
    %106 = vmatprep.subr.bf16.mxu0 0
    %107 = vmatpush1.bf16.msra.mxu0 0
    %108 = vmatprep.subr.bf16.mxu0 0
    %109 = vmatpush1.bf16.msra.mxu0 0
    %110 = vmatprep.subr.bf16.mxu0 0
    %111 = vmatpush1.bf16.msra.mxu0 0
    %112 = vmatprep.subr.bf16.mxu0 0
    %113 = vmatpush1.bf16.msra.mxu0 0
    %114 = vmatprep.subr.bf16.mxu0 0
    %115 = vmatpush1.bf16.msra.mxu0 0
    %116 = vmatprep.subr.bf16.mxu0 0
    %117 = vmatpush1.bf16.msra.mxu0 0
    %118 = vmatprep.subr.bf16.mxu0 0
    %119 = vmatpush1.bf16.msra.mxu0 0
    %120 = vmatprep.subr.bf16.mxu0 0
    %121 = vmatpush1.bf16.msra.mxu0 0
    %122 = vmatprep.subr.bf16.mxu0 0
    %123 = vmatpush1.bf16.msra.mxu0 0
    %124 = vmatprep.subr.bf16.mxu0 0
    %125 = vmatpush1.bf16.msra.mxu0 0
    %126 = vmatprep.subr.bf16.mxu0 0
    %127 = vmatpush1.bf16.msra.mxu0 0
    %128 = vmatprep.mubr.bf16.mxu0 0
    %129 = vmatmul.mubr.bf16.gmra.mrb[0].mxu0 %v94
    %v130 = vpop.f32.mrb[0].mxu0
    %v131 = vadd.f32 %v66, %v130
    %v132 = vpop.f32.mrb[0].mxu0
    %v133 = vpop.f32.mrb[0].mxu0
    %v134 = vadd.f32 %v66, %v133
    %v135 = vpop.f32.mrb[0].mxu0
    %136 = vdwg.mxu0
    %v137 = vld [vmem:[%s4] sm:$0xf]
    %v138 = vld [vmem:[%s4 + $0x4] sm:$0xf]
    %v139 = vld [vmem:[%s4 + $0x8] sm:$0xf]
    %v140 = vld [vmem:[%s4 + $0xc] sm:$0xf]
    %v141 = vld [vmem:[%s4 + $0x10] sm:$0xf]
    %v142 = vld [vmem:[%s4 + $0x14] sm:$0xf]
    %v143 = vld [vmem:[%s4 + $0x18] sm:$0xf]
    %v144 = vld [vmem:[%s4 + $0x1c] sm:$0xf]
    %v145 = vld [vmem:[%s4 + $0x20] sm:$0xf]
    %v146 = vld [vmem:[%s4 + $0x24] sm:$0xf]
    %v147 = vld [vmem:[%s4 + $0x28] sm:$0xf]
    %v148 = vld [vmem:[%s4 + $0x2c] sm:$0xf]
    %v149 = vld [vmem:[%s5] sm:$0x1]
    %v151 = vlaneseq
    %v152 = vshrl.u32 %v151, 7
    %v153 = vsub.s32 0, %v152
    %v154 = vrot.slane %v149, %v153
    %v168 = vunpack.c.l.b16 %v137
    %v169 = vunpack.c.l.b16 %v138
    %v170 = vunpack.c.l.b16 %v139
    %v171 = vunpack.c.l.b16 %v140
    %v172 = vunpack.c.l.b16 %v141
    %v173 = vunpack.c.l.b16 %v142
    %v174 = vunpack.c.l.b16 %v143
    %v175 = vunpack.c.l.b16 %v144
    %v176 = vunpack.c.l.b16 %v145
    %v177 = vunpack.c.l.b16 %v146
    %v178 = vunpack.c.l.b16 %v147
    %v179 = vunpack.c.l.b16 %v148
    %v180 = vpack.c.b16 %v169, %v168
    %v181 = vpack.c.b16 %v171, %v170
    %v182 = vpack.c.b16 %v173, %v172
    %v183 = vpack.c.b16 %v175, %v174
    %v184 = vpack.c.b16 %v177, %v176
    %v185 = vpack.c.b16 %v179, %v178
    %vm192 = vcmask 785408
    %v194 = vsel %vm192, %v52, 0
    %196 = vmatprep.subr.bf16.mxu0 0
    %197 = vmatpush1.bf16.msra.mxu0 %v180
    %198 = vmatprep.subr.bf16.mxu0 0
    %199 = vmatpush1.bf16.msra.mxu0 %v181
    %200 = vmatprep.subr.bf16.mxu0 0
    %201 = vmatpush1.bf16.msra.mxu0 %v182
    %202 = vmatprep.subr.bf16.mxu0 0
    %203 = vmatpush1.bf16.msra.mxu0 %v183
    %204 = vmatprep.subr.bf16.mxu0 0
    %205 = vmatpush1.bf16.msra.mxu0 %v184
    %206 = vmatprep.subr.bf16.mxu0 0
    %207 = vmatpush1.bf16.msra.mxu0 %v185
    %208 = vmatprep.subr.bf16.mxu0 0
    %209 = vmatpush1.bf16.msra.mxu0 0
    %210 = vmatprep.subr.bf16.mxu0 0
    %211 = vmatpush1.bf16.msra.mxu0 0
    %212 = vmatprep.subr.bf16.mxu0 0
    %213 = vmatpush1.bf16.msra.mxu0 0
    %214 = vmatprep.subr.bf16.mxu0 0
    %215 = vmatpush1.bf16.msra.mxu0 0
    %216 = vmatprep.subr.bf16.mxu0 0
    %217 = vmatpush1.bf16.msra.mxu0 0
    %218 = vmatprep.subr.bf16.mxu0 0
    %219 = vmatpush1.bf16.msra.mxu0 0
    %220 = vmatprep.subr.bf16.mxu0 0
    %221 = vmatpush1.bf16.msra.mxu0 0
    %222 = vmatprep.subr.bf16.mxu0 0
    %223 = vmatpush1.bf16.msra.mxu0 0
    %224 = vmatprep.subr.bf16.mxu0 0
    %225 = vmatpush1.bf16.msra.mxu0 0
    %226 = vmatprep.subr.bf16.mxu0 0
    %227 = vmatpush1.bf16.msra.mxu0 0
    %228 = vmatprep.mubr.bf16.mxu0 0
    %229 = vmatmul.mubr.bf16.gmra.mrb[0].mxu0 %v194
    %v230 = vpop.f32.mrb[0].mxu0
    %v231 = vadd.f32 %v154, %v230
    %v232 = vpop.f32.mrb[0].mxu0
    %v233 = vpop.f32.mrb[0].mxu0
    %v234 = vadd.f32 %v154, %v233
    %v235 = vpop.f32.mrb[0].mxu0
    %236 = vdwg.mxu0
    %v237 = vld [vmem:[%s6] sm:$0xf]
    %v238 = vld [vmem:[%s6 + $0x4] sm:$0xf]
    %v239 = vld [vmem:[%s6 + $0x8] sm:$0xf]
    %v240 = vld [vmem:[%s6 + $0xc] sm:$0xf]
    %v241 = vld [vmem:[%s6 + $0x10] sm:$0xf]
    %v242 = vld [vmem:[%s6 + $0x14] sm:$0xf]
    %v243 = vld [vmem:[%s6 + $0x18] sm:$0xf]
    %v244 = vld [vmem:[%s6 + $0x1c] sm:$0xf]
    %v245 = vld [vmem:[%s7] sm:$0xf]
    %v246 = vld [vmem:[%s7 + $0x4] sm:$0xf]
    %v247 = vld [vmem:[%s7 + $0x8] sm:$0xf]
    %v248 = vld [vmem:[%s7 + $0xc] sm:$0xf]
    %v249 = vld [vmem:[%s7 + $0x10] sm:$0xf]
    %v250 = vld [vmem:[%s7 + $0x14] sm:$0xf]
    %v251 = vld [vmem:[%s7 + $0x18] sm:$0xf]
    %v252 = vld [vmem:[%s7 + $0x1c] sm:$0xf]
    %v253 = vld [vmem:[%s7 + $0x20] sm:$0xf]
    %v254 = vld [vmem:[%s7 + $0x24] sm:$0xf]
    %v255 = vld [vmem:[%s7 + $0x28] sm:$0xf]
    %v256 = vld [vmem:[%s7 + $0x2c] sm:$0xf]
    %v269 = vunpack.c.l.b16 %v245
    %v270 = vunpack.c.l.b16 %v246
    %v271 = vunpack.c.l.b16 %v247
    %v272 = vunpack.c.l.b16 %v248
    %v273 = vunpack.c.l.b16 %v249
    %v274 = vunpack.c.l.b16 %v250
    %v275 = vunpack.c.l.b16 %v251
    %v276 = vunpack.c.l.b16 %v252
    %v277 = vunpack.c.l.b16 %v253
    %v278 = vunpack.c.l.b16 %v254
    %v279 = vunpack.c.l.b16 %v255
    %v280 = vunpack.c.l.b16 %v256
    %v281 = vpack.c.b16 %v270, %v269
    %v282 = vpack.c.b16 %v272, %v271
    %v283 = vpack.c.b16 %v274, %v273
    %v284 = vpack.c.b16 %v276, %v275
    %v285 = vpack.c.b16 %v278, %v277
    %v286 = vpack.c.b16 %v280, %v279
    %293 = vmatprep.subr.bf16.mxu0 0
    %294 = vmatpush1.bf16.msra.mxu0 %v281
    %295 = vmatprep.subr.bf16.mxu0 0
    %296 = vmatpush1.bf16.msra.mxu0 %v282
    %297 = vmatprep.subr.bf16.mxu0 0
    %298 = vmatpush1.bf16.msra.mxu0 %v283
    %299 = vmatprep.subr.bf16.mxu0 0
    %300 = vmatpush1.bf16.msra.mxu0 %v284
    %301 = vmatprep.subr.bf16.mxu0 0
    %302 = vmatpush1.bf16.msra.mxu0 %v285
    %303 = vmatprep.subr.bf16.mxu0 0
    %304 = vmatpush1.bf16.msra.mxu0 %v286
    %305 = vmatprep.subr.bf16.mxu0 0
    %306 = vmatpush1.bf16.msra.mxu0 0
    %307 = vmatprep.subr.bf16.mxu0 0
    %308 = vmatpush1.bf16.msra.mxu0 0
    %309 = vmatprep.subr.bf16.mxu0 0
    %310 = vmatpush1.bf16.msra.mxu0 0
    %311 = vmatprep.subr.bf16.mxu0 0
    %312 = vmatpush1.bf16.msra.mxu0 0
    %313 = vmatprep.subr.bf16.mxu0 0
    %314 = vmatpush1.bf16.msra.mxu0 0
    %315 = vmatprep.subr.bf16.mxu0 0
    %316 = vmatpush1.bf16.msra.mxu0 0
    %317 = vmatprep.subr.bf16.mxu0 0
    %318 = vmatpush1.bf16.msra.mxu0 0
    %319 = vmatprep.subr.bf16.mxu0 0
    %320 = vmatpush1.bf16.msra.mxu0 0
    %321 = vmatprep.subr.bf16.mxu0 0
    %322 = vmatpush1.bf16.msra.mxu0 0
    %323 = vmatprep.subr.bf16.mxu0 0
    %324 = vmatpush1.bf16.msra.mxu0 0
    %325 = vmatprep.mubr.bf16.mxu0 0
    %326 = vmatmul.mubr.bf16.gmra.mrb[0].mxu0 %v194
    %v327 = vpop.f32.mrb[0].mxu0
    %v328 = vadd.f32 0.0, %v327
    %v329 = vpop.f32.mrb[0].mxu0
    %v330 = vpop.f32.mrb[0].mxu0
    %v331 = vadd.f32 0.0, %v330
    %v332 = vpop.f32.mrb[0].mxu0
    %333 = vdwg.mxu0
    %v342 = vunpack.c.l.b16 %v237
    %v343 = vunpack.c.l.b16 %v238
    %v344 = vunpack.c.l.b16 %v239
    %v345 = vunpack.c.l.b16 %v240
    %v346 = vunpack.c.l.b16 %v241
    %v347 = vunpack.c.l.b16 %v242
    %v348 = vunpack.c.l.b16 %v243
    %v349 = vunpack.c.l.b16 %v244
    %v350 = vpack.c.b16 %v343, %v342
    %v351 = vpack.c.b16 %v345, %v344
    %v352 = vpack.c.b16 %v347, %v346
    %v353 = vpack.c.b16 %v349, %v348
    %358 = vmatprep.subr.bf16.mxu0 0
    %359 = vmatpush1.bf16.msra.mxu0 %v350
    %360 = vmatprep.subr.bf16.mxu0 0
    %361 = vmatpush1.bf16.msra.mxu0 %v351
    %362 = vmatprep.subr.bf16.mxu0 0
    %363 = vmatpush1.bf16.msra.mxu0 %v352
    %364 = vmatprep.subr.bf16.mxu0 0
    %365 = vmatpush1.bf16.msra.mxu0 %v353
    %366 = vmatprep.subr.bf16.mxu0 0
    %367 = vmatpush1.bf16.msra.mxu0 0
    %368 = vmatprep.subr.bf16.mxu0 0
    %369 = vmatpush1.bf16.msra.mxu0 0
    %370 = vmatprep.subr.bf16.mxu0 0
    %371 = vmatpush1.bf16.msra.mxu0 0
    %372 = vmatprep.subr.bf16.mxu0 0
    %373 = vmatpush1.bf16.msra.mxu0 0
    %374 = vmatprep.subr.bf16.mxu0 0
    %375 = vmatpush1.bf16.msra.mxu0 0
    %376 = vmatprep.subr.bf16.mxu0 0
    %377 = vmatpush1.bf16.msra.mxu0 0
    %378 = vmatprep.subr.bf16.mxu0 0
    %379 = vmatpush1.bf16.msra.mxu0 0
    %380 = vmatprep.subr.bf16.mxu0 0
    %381 = vmatpush1.bf16.msra.mxu0 0
    %382 = vmatprep.subr.bf16.mxu0 0
    %383 = vmatpush1.bf16.msra.mxu0 0
    %384 = vmatprep.subr.bf16.mxu0 0
    %385 = vmatpush1.bf16.msra.mxu0 0
    %386 = vmatprep.subr.bf16.mxu0 0
    %387 = vmatpush1.bf16.msra.mxu0 0
    %388 = vmatprep.subr.bf16.mxu0 0
    %389 = vmatpush1.bf16.msra.mxu0 0
    %390 = vmatprep.mubr.bf16.mxu0 0
    %391 = vmatmul.mubr.bf16.gmra.mrb[0].mxu0 %v94
    %v392 = vpop.f32.mrb[0].mxu0
    %v393 = vadd.f32 %v328, %v392
    %v394 = vpop.f32.mrb[0].mxu0
    %v395 = vpop.f32.mrb[0].mxu0
    %v396 = vadd.f32 %v331, %v395
    %v397 = vpop.f32.mrb[0].mxu0
    %398 = vdwg.mxu0
    %v399 = vld [vmem:[%s8] sm:$0x1]
    %v401 = vlaneseq
    %v402 = vshrl.u32 %v401, 7
    %v403 = vsub.s32 0, %v402
    %v404 = vrot.slane %v399, %v403
    %v406 = vadd.f32 %v393, %v404
    %v407 = vadd.f32 %v396, %v404
    %v408 = vxor.u32 %v406, 2147483648
    %v409 = vxor.u32 %v407, 2147483648
    %v410 = vmul.f32 %v408, 1.442695
    %v411 = vpow.pop %v410
    %v412 = vmul.f32 %v409, 1.442695
    %v413 = vpow.pop %v412
    %v414 = vadd.f32 %v411, 1.0
    %v415 = vadd.f32 %v413, 1.0
    %v416 = vrcp.pop %v414
    %v417 = vmul.f32 1.0, %v416
    %v418 = vrcp.pop %v415
    %v419 = vmul.f32 1.0, %v418
    %v420 = vsub.f32 %v231, %v131
    %v421 = vsub.f32 %v234, %v134
    %v422 = vmul.f32 %v417, %v420
    %v423 = vmul.f32 %v419, %v421
    %v424 = vadd.f32 %v131, %v422
    %v425 = vadd.f32 %v134, %v423
    %v426 = vxor.u32 %v424, 2147483648
    %v427 = vxor.u32 %v425, 2147483648
    %v428 = vmul.f32 %v426, 1.442695
    %v429 = vpow.pop %v428
    %v430 = vmul.f32 %v427, 1.442695
    %v431 = vpow.pop %v430
    %v432 = vadd.f32 %v429, 1.0
    %v433 = vadd.f32 %v431, 1.0
    %v434 = vrcp.pop %v432
    %v435 = vmul.f32 1.0, %v434
    %v436 = vrcp.pop %v433
    %v437 = vmul.f32 1.0, %v436
    %v438 = vmul.f32 %v424, %v435
    %v439 = vmul.f32 %v425, %v437
    %v440 = vld [vmem:[#allocation2] sm:$0xff]
    %v441 = vld [vmem:[#allocation2 + $0x8] sm:$0xff]
    %v442 = vpack.c.bf16 %v439, %v438
    %v443 = vld [vmem:[%s9] sm:$0xf]
    %v444 = vld [vmem:[%s9 + $0x4] sm:$0xf]
    %v445 = vld [vmem:[%s9 + $0x8] sm:$0xf]
    %v446 = vld [vmem:[%s9 + $0xc] sm:$0xf]
    %v451 = vunpack.c.l.b16 %v443
    %v452 = vunpack.c.l.b16 %v444
    %v453 = vunpack.c.l.b16 %v445
    %v454 = vunpack.c.l.b16 %v446
    %v455 = vpack.c.b16 %v452, %v451
    %v456 = vpack.c.b16 %v454, %v453
    %vm459 = vcmask 261120
    %v461 = vsel %vm459, %v442, 0
    %463 = vmatprep.subr.bf16.mxu0 0
    %464 = vmatpush1.bf16.msra.mxu0 %v455
    %465 = vmatprep.subr.bf16.mxu0 0
    %466 = vmatpush1.bf16.msra.mxu0 %v456
    %467 = vmatprep.subr.bf16.mxu0 0
    %468 = vmatpush1.bf16.msra.mxu0 0
    %469 = vmatprep.subr.bf16.mxu0 0
    %470 = vmatpush1.bf16.msra.mxu0 0
    %471 = vmatprep.subr.bf16.mxu0 0
    %472 = vmatpush1.bf16.msra.mxu0 0
    %473 = vmatprep.subr.bf16.mxu0 0
    %474 = vmatpush1.bf16.msra.mxu0 0
    %475 = vmatprep.subr.bf16.mxu0 0
    %476 = vmatpush1.bf16.msra.mxu0 0
    %477 = vmatprep.subr.bf16.mxu0 0
    %478 = vmatpush1.bf16.msra.mxu0 0
    %479 = vmatprep.subr.bf16.mxu0 0
    %480 = vmatpush1.bf16.msra.mxu0 0
    %481 = vmatprep.subr.bf16.mxu0 0
    %482 = vmatpush1.bf16.msra.mxu0 0
    %483 = vmatprep.subr.bf16.mxu0 0
    %484 = vmatpush1.bf16.msra.mxu0 0
    %485 = vmatprep.subr.bf16.mxu0 0
    %486 = vmatpush1.bf16.msra.mxu0 0
    %487 = vmatprep.subr.bf16.mxu0 0
    %488 = vmatpush1.bf16.msra.mxu0 0
    %489 = vmatprep.subr.bf16.mxu0 0
    %490 = vmatpush1.bf16.msra.mxu0 0
    %491 = vmatprep.subr.bf16.mxu0 0
    %492 = vmatpush1.bf16.msra.mxu0 0
    %493 = vmatprep.subr.bf16.mxu0 0
    %494 = vmatpush1.bf16.msra.mxu0 0
    %495 = vmatprep.mubr.bf16.mxu0 0
    %496 = vmatmul.mubr.bf16.gmra.mrb[0].mxu0 %v461
    %v497 = vpop.f32.mrb[0].mxu0
    %v498 = vadd.f32 0.0, %v497
    %v499 = vpop.f32.mrb[0].mxu0
    %v500 = vpop.f32.mrb[0].mxu0
    %v501 = vadd.f32 0.0, %v500
    %v502 = vpop.f32.mrb[0].mxu0
    %503 = vdwg.mxu0
    %v504 = vadd.f32 %v440, %v498
    %v505 = vadd.f32 %v441, %v501
    %506 = vst.msk [vmem:[#allocation2] sm:$0xff] %vm459, %v504
    %507 = vst.msk [vmem:[#allocation2 + $0x8] sm:$0xff] %vm459, %v505
    // Predicated region
    $region50: #{tpu_custom_call.1} parent=1 // pred_check
      %p508 = pneg %p40
    $region51: #{tpu_custom_call.1} parent=1 // pred_check_branch
      %510 = sbr.rel (%p508) target = $region53
    $region52: #{tpu_custom_call.1} parent=1 // pred_region
      %v511 = vld [vmem:[#allocation2] sm:$0xff]
      %v512 = vld [vmem:[#allocation2 + $0x8] sm:$0xff]
      %v513 = vld [vmem:[%s10] sm:$0x1]
      %v515 = vlaneseq
      %v516 = vshrl.u32 %v515, 7
      %v517 = vsub.s32 0, %v516
      %v518 = vrot.slane %v513, %v517
      %v520 = vadd.f32 %v511, %v518
      %v521 = vadd.f32 %v512, %v518
      %v522 = vpack.c.bf16 %v521, %v520
      %v524 = vunpack.c.l.b16 %v522
      %v525 = vunpack.c.h.b16 %v522
      %v526 = vpack.c.b16 %v524, %v524
      %v527 = vpack.c.b16 %v525, %v525
      %vm530 = vcmask 257024
      %531 = vst.msk [vmem:[#allocation3] sm:$0xf] %vm530, %v526
      %532 = vst.msk [vmem:[#allocation3 + $0x4] sm:$0xf] %vm530, %v527
    $region53: #{tpu_custom_call.1} parent=1 // pred_fallthru
      _
    // Predicated region
    $region54: #{tpu_custom_call.1} parent=1 // pred_check
      _
    $region55: #{tpu_custom_call.1} parent=1 // pred_check_branch
      %534 = sbr.rel (0) target = $region57
    $region56: #{tpu_custom_call.1} parent=1 // pred_region
      %s536 = ssub.s32 128, 128
      %537 = vsyncadd [#allocation4], %s536
      %s538 = sshll.u32 [#allocation3], 4
      %s539 = int_to_ptr.vmem [resolvable:$true] %s538
      %544 = dma.vmem_to_hbm [thread:$0]  %s539, 128, %s11, [#allocation4], 64, 64, 4
    $region57: #{tpu_custom_call.1} parent=1 // pred_fallthru
      _
    // Predicated region
    $region58: #{tpu_custom_call.1} parent=1 // pred_check
      _
    $region59: #{tpu_custom_call.1} parent=1 // pred_check_branch
      %546 = sbr.rel (0) target = $region61
    $region60: #{tpu_custom_call.1} parent=1 // pred_region
      %547 = dma.done [#allocation4], 128
    $region61: #{tpu_custom_call.1} parent=1 // pred_fallthru
      _
    %548 = vsyncpa [#allocation4], 1

// kernel: tpu_custom_call.1
$region0: #{tpu_custom_call.1}
  #allocation0 [shape = 'u32[]', space=smem, size = 0x4, offset = 0x4, fixed_abs, tag = 'smem constant byte address 0x4 - core index']
  #allocation1 [shape = 'u32[144,128]{1,0:T(1,128)}', space=vmem, size = 0x12000, scoped, tag = 'internal scratch']
  #allocation2 [shape = 'f32[16,32]{1,0:T(8,128)}', space=vmem, size = 0x2000, scoped, tag = 'scratch operand']
  %s0 = inlined_call_operand.vmem [shape: f32[16,64], index: 0, kind: input, shape index: {}]
  %s1 = inlined_call_operand.vmem [shape: f32[16,96], index: 1, kind: input, shape index: {}]
  %s2 = inlined_call_operand.vmem [shape: bf16[64,32], index: 2, kind: input, shape index: {}]
  %s3 = inlined_call_operand.vmem [shape: f32[1,32], index: 3, kind: input, shape index: {}]
  %s4 = inlined_call_operand.vmem [shape: bf16[96,32], index: 4, kind: input, shape index: {}]
  %s5 = inlined_call_operand.vmem [shape: f32[1,32], index: 5, kind: input, shape index: {}]
  %s6 = inlined_call_operand.vmem [shape: bf16[64,32], index: 6, kind: input, shape index: {}]
  %s7 = inlined_call_operand.vmem [shape: bf16[96,32], index: 7, kind: input, shape index: {}]
  %s8 = inlined_call_operand.vmem [shape: f32[1,32], index: 8, kind: input, shape index: {}]
  %s9 = inlined_call_operand.vmem [shape: bf16[32,32], index: 9, kind: input, shape index: {}]
  %s10 = inlined_call_operand.vmem [shape: f32[1,32], index: 10, kind: input, shape index: {}]
  %s11 = inlined_call_operand.hbm [shape: bf16[16,32], index: 11, kind: output, shape index: {}]
  %s12 = sld [smem:[#allocation0]]
  $region62: #{tpu_custom_call.1} parent=0
    _
  %s14 = ssub.s32 1, %s12
  %s15 = scalar_select 0, %s14, %s12
  $region1: #{tpu_custom_call.1} parent=0
    #allocation3 [shape = 'u8[4096]{0}', space=vmem, size = 0x1000, scoped, tag = 'output window, operand 0, single buffered']
    #allocation4 [shape = 's32[1]{0}', space=sflag, size = 0x4, scoped, tag = 'scoped memory for tpu_custom_call.1']
    %16 = vsyncpa [#allocation4], 0
    // Predicated region
    $region2: #{tpu_custom_call.1} parent=1 // pred_check
      _
    $region3: #{tpu_custom_call.1} parent=1 // pred_check_branch
      %18 = sbr.rel (0) target = $region5
    $region4: #{tpu_custom_call.1} parent=1 // pred_region
      _
    $region5: #{tpu_custom_call.1} parent=1 // pred_fallthru
      _
    // Predicated region
    $region6: #{tpu_custom_call.1} parent=1 // pred_check
      _
    $region7: #{tpu_custom_call.1} parent=1 // pred_check_branch
      %20 = sbr.rel (0) target = $region9
    $region8: #{tpu_custom_call.1} parent=1 // pred_region
      _
    $region9: #{tpu_custom_call.1} parent=1 // pred_fallthru
      _
    // Predicated region
    $region10: #{tpu_custom_call.1} parent=1 // pred_check
      _
    $region11: #{tpu_custom_call.1} parent=1 // pred_check_branch
      %22 = sbr.rel (0) target = $region13
    $region12: #{tpu_custom_call.1} parent=1 // pred_region
      _
    $region13: #{tpu_custom_call.1} parent=1 // pred_fallthru
      _
    // Predicated region
    $region14: #{tpu_custom_call.1} parent=1 // pred_check
      _
    $region15: #{tpu_custom_call.1} parent=1 // pred_check_branch
      %24 = sbr.rel (0) target = $region17
    $region16: #{tpu_custom_call.1} parent=1 // pred_region
      _
    $region17: #{tpu_custom_call.1} parent=1 // pred_fallthru
      _
    // Predicated region
    $region18: #{tpu_custom_call.1} parent=1 // pred_check
      _
    $region19: #{tpu_custom_call.1} parent=1 // pred_check_branch
      %26 = sbr.rel (0) target = $region21
    $region20: #{tpu_custom_call.1} parent=1 // pred_region
      _
    $region21: #{tpu_custom_call.1} parent=1 // pred_fallthru
      _
    // Predicated region
    $region22: #{tpu_custom_call.1} parent=1 // pred_check
      _
    $region23: #{tpu_custom_call.1} parent=1 // pred_check_branch
      %28 = sbr.rel (0) target = $region25
    $region24: #{tpu_custom_call.1} parent=1 // pred_region
      _
    $region25: #{tpu_custom_call.1} parent=1 // pred_fallthru
      _
    // Predicated region
    $region26: #{tpu_custom_call.1} parent=1 // pred_check
      _
    $region27: #{tpu_custom_call.1} parent=1 // pred_check_branch
      %30 = sbr.rel (0) target = $region29
    $region28: #{tpu_custom_call.1} parent=1 // pred_region
      _
    $region29: #{tpu_custom_call.1} parent=1 // pred_fallthru
      _
    // Predicated region
    $region30: #{tpu_custom_call.1} parent=1 // pred_check
      _
    $region31: #{tpu_custom_call.1} parent=1 // pred_check_branch
      %32 = sbr.rel (0) target = $region33
    $region32: #{tpu_custom_call.1} parent=1 // pred_region
      _
    $region33: #{tpu_custom_call.1} parent=1 // pred_fallthru
      _
    // Predicated region
    $region34: #{tpu_custom_call.1} parent=1 // pred_check
      _
    $region35: #{tpu_custom_call.1} parent=1 // pred_check_branch
      %34 = sbr.rel (0) target = $region37
    $region36: #{tpu_custom_call.1} parent=1 // pred_region
      _
    $region37: #{tpu_custom_call.1} parent=1 // pred_fallthru
      _
    // Predicated region
    $region38: #{tpu_custom_call.1} parent=1 // pred_check
      _
    $region39: #{tpu_custom_call.1} parent=1 // pred_check_branch
      %36 = sbr.rel (0) target = $region41
    $region40: #{tpu_custom_call.1} parent=1 // pred_region
      _
    $region41: #{tpu_custom_call.1} parent=1 // pred_fallthru
      _
    // Predicated region
    $region42: #{tpu_custom_call.1} parent=1 // pred_check
      _
    $region43: #{tpu_custom_call.1} parent=1 // pred_check_branch
      %38 = sbr.rel (0) target = $region45
    $region44: #{tpu_custom_call.1} parent=1 // pred_region
      _
    $region45: #{tpu_custom_call.1} parent=1 // pred_fallthru
      _
    %p40 = scmp.eq.s32.totalorder 0, 0
    // Predicated region
    $region46: #{tpu_custom_call.1} parent=1 // pred_check
      %p41 = pneg %p40
    $region47: #{tpu_custom_call.1} parent=1 // pred_check_branch
      %43 = sbr.rel (%p41) target = $region49
    $region48: #{tpu_custom_call.1} parent=1 // pred_region
      %vm44 = vcmask 261120
      %45 = vst.msk [vmem:[#allocation2] sm:$0xff] %vm44, 0.0
      %46 = vst.msk [vmem:[#allocation2 + $0x8] sm:$0xff] %vm44, 0.0
    $region49: #{tpu_custom_call.1} parent=1 // pred_fallthru
      _
    %v47 = vld [vmem:[%s0] sm:$0xff]
    %v48 = vld [vmem:[%s0 + $0x8] sm:$0xff]
    %v49 = vld [vmem:[%s1] sm:$0xff]
    %v50 = vld [vmem:[%s1 + $0x8] sm:$0xff]
    %v51 = vpack.c.bf16 %v48, %v47
    %v52 = vpack.c.bf16 %v50, %v49
    %v53 = vld [vmem:[%s2] sm:$0xf]
    %v54 = vld [vmem:[%s2 + $0x4] sm:$0xf]
    %v55 = vld [vmem:[%s2 + $0x8] sm:$0xf]
    %v56 = vld [vmem:[%s2 + $0xc] sm:$0xf]
    %v57 = vld [vmem:[%s2 + $0x10] sm:$0xf]
    %v58 = vld [vmem:[%s2 + $0x14] sm:$0xf]
    %v59 = vld [vmem:[%s2 + $0x18] sm:$0xf]
    %v60 = vld [vmem:[%s2 + $0x1c] sm:$0xf]
    %v61 = vld [vmem:[%s3] sm:$0x1]
    %v63 = vlaneseq
    %v64 = vshrl.u32 %v63, 7
    %v65 = vsub.s32 0, %v64
    %v66 = vrot.slane %v61, %v65
    %v76 = vunpack.c.l.b16 %v53
    %v77 = vunpack.c.l.b16 %v54
    %v78 = vunpack.c.l.b16 %v55
    %v79 = vunpack.c.l.b16 %v56
    %v80 = vunpack.c.l.b16 %v57
    %v81 = vunpack.c.l.b16 %v58
    %v82 = vunpack.c.l.b16 %v59
    %v83 = vunpack.c.l.b16 %v60
    %v84 = vpack.c.b16 %v77, %v76
    %v85 = vpack.c.b16 %v79, %v78
    %v86 = vpack.c.b16 %v81, %v80
    %v87 = vpack.c.b16 %v83, %v82
    %vm92 = vcmask 523264
    %v94 = vsel %vm92, %v51, 0
    %96 = vmatprep.subr.bf16.mxu0 0
    %97 = vmatpush1.bf16.msra.mxu0 %v84
    %98 = vmatprep.subr.bf16.mxu0 0
    %99 = vmatpush1.bf16.msra.mxu0 %v85
    %100 = vmatprep.subr.bf16.mxu0 0
    %101 = vmatpush1.bf16.msra.mxu0 %v86
    %102 = vmatprep.subr.bf16.mxu0 0
    %103 = vmatpush1.bf16.msra.mxu0 %v87
    %104 = vmatprep.subr.bf16.mxu0 0
    %105 = vmatpush1.bf16.msra.mxu0 0
    %106 = vmatprep.subr.bf16.mxu0 0
    %107 = vmatpush1.bf16.msra.mxu0 0
    %108 = vmatprep.subr.bf16.mxu0 0
    %109 = vmatpush1.bf16.msra.mxu0 0
    %110 = vmatprep.subr.bf16.mxu0 0
    %111 = vmatpush1.bf16.msra.mxu0 0
    %112 = vmatprep.subr.bf16.mxu0 0
    %113 = vmatpush1.bf16.msra.mxu0 0
    %114 = vmatprep.subr.bf16.mxu0 0
    %115 = vmatpush1.bf16.msra.mxu0 0
    %116 = vmatprep.subr.bf16.mxu0 0
    %117 = vmatpush1.bf16.msra.mxu0 0
    %118 = vmatprep.subr.bf16.mxu0 0
    %119 = vmatpush1.bf16.msra.mxu0 0
    %120 = vmatprep.subr.bf16.mxu0 0
    %121 = vmatpush1.bf16.msra.mxu0 0
    %122 = vmatprep.subr.bf16.mxu0 0
    %123 = vmatpush1.bf16.msra.mxu0 0
    %124 = vmatprep.subr.bf16.mxu0 0
    %125 = vmatpush1.bf16.msra.mxu0 0
    %126 = vmatprep.subr.bf16.mxu0 0
    %127 = vmatpush1.bf16.msra.mxu0 0
    %128 = vmatprep.mubr.bf16.mxu0 0
    %129 = vmatmul.mubr.bf16.gmra.mrb[0].mxu0 %v94
    %v130 = vpop.f32.mrb[0].mxu0
    %v131 = vadd.f32 %v66, %v130
    %v132 = vpop.f32.mrb[0].mxu0
    %v133 = vpop.f32.mrb[0].mxu0
    %v134 = vadd.f32 %v66, %v133
    %v135 = vpop.f32.mrb[0].mxu0
    %136 = vdwg.mxu0
    %v137 = vld [vmem:[%s4] sm:$0xf]
    %v138 = vld [vmem:[%s4 + $0x4] sm:$0xf]
    %v139 = vld [vmem:[%s4 + $0x8] sm:$0xf]
    %v140 = vld [vmem:[%s4 + $0xc] sm:$0xf]
    %v141 = vld [vmem:[%s4 + $0x10] sm:$0xf]
    %v142 = vld [vmem:[%s4 + $0x14] sm:$0xf]
    %v143 = vld [vmem:[%s4 + $0x18] sm:$0xf]
    %v144 = vld [vmem:[%s4 + $0x1c] sm:$0xf]
    %v145 = vld [vmem:[%s4 + $0x20] sm:$0xf]
    %v146 = vld [vmem:[%s4 + $0x24] sm:$0xf]
    %v147 = vld [vmem:[%s4 + $0x28] sm:$0xf]
    %v148 = vld [vmem:[%s4 + $0x2c] sm:$0xf]
    %v149 = vld [vmem:[%s5] sm:$0x1]
    %v151 = vlaneseq
    %v152 = vshrl.u32 %v151, 7
    %v153 = vsub.s32 0, %v152
    %v154 = vrot.slane %v149, %v153
    %v168 = vunpack.c.l.b16 %v137
    %v169 = vunpack.c.l.b16 %v138
    %v170 = vunpack.c.l.b16 %v139
    %v171 = vunpack.c.l.b16 %v140
    %v172 = vunpack.c.l.b16 %v141
    %v173 = vunpack.c.l.b16 %v142
    %v174 = vunpack.c.l.b16 %v143
    %v175 = vunpack.c.l.b16 %v144
    %v176 = vunpack.c.l.b16 %v145
    %v177 = vunpack.c.l.b16 %v146
    %v178 = vunpack.c.l.b16 %v147
    %v179 = vunpack.c.l.b16 %v148
    %v180 = vpack.c.b16 %v169, %v168
    %v181 = vpack.c.b16 %v171, %v170
    %v182 = vpack.c.b16 %v173, %v172
    %v183 = vpack.c.b16 %v175, %v174
    %v184 = vpack.c.b16 %v177, %v176
    %v185 = vpack.c.b16 %v179, %v178
    %vm192 = vcmask 785408
    %v194 = vsel %vm192, %v52, 0
    %196 = vmatprep.subr.bf16.mxu0 0
    %197 = vmatpush1.bf16.msra.mxu0 %v180
    %198 = vmatprep.subr.bf16.mxu0 0
    %199 = vmatpush1.bf16.msra.mxu0 %v181
    %200 = vmatprep.subr.bf16.mxu0 0
    %201 = vmatpush1.bf16.msra.mxu0 %v182
    %202 = vmatprep.subr.bf16.mxu0 0
    %203 = vmatpush1.bf16.msra.mxu0 %v183
    %204 = vmatprep.subr.bf16.mxu0 0
    %205 = vmatpush1.bf16.msra.mxu0 %v184
    %206 = vmatprep.subr.bf16.mxu0 0
    %207 = vmatpush1.bf16.msra.mxu0 %v185
    %208 = vmatprep.subr.bf16.mxu0 0
    %209 = vmatpush1.bf16.msra.mxu0 0
    %210 = vmatprep.subr.bf16.mxu0 0
    %211 = vmatpush1.bf16.msra.mxu0 0
    %212 = vmatprep.subr.bf16.mxu0 0
    %213 = vmatpush1.bf16.msra.mxu0 0
    %214 = vmatprep.subr.bf16.mxu0 0
    %215 = vmatpush1.bf16.msra.mxu0 0
    %216 = vmatprep.subr.bf16.mxu0 0
    %217 = vmatpush1.bf16.msra.mxu0 0
    %218 = vmatprep.subr.bf16.mxu0 0
    %219 = vmatpush1.bf16.msra.mxu0 0
    %220 = vmatprep.subr.bf16.mxu0 0
    %221 = vmatpush1.bf16.msra.mxu0 0
    %222 = vmatprep.subr.bf16.mxu0 0
    %223 = vmatpush1.bf16.msra.mxu0 0
    %224 = vmatprep.subr.bf16.mxu0 0
    %225 = vmatpush1.bf16.msra.mxu0 0
    %226 = vmatprep.subr.bf16.mxu0 0
    %227 = vmatpush1.bf16.msra.mxu0 0
    %228 = vmatprep.mubr.bf16.mxu0 0
    %229 = vmatmul.mubr.bf16.gmra.mrb[0].mxu0 %v194
    %v230 = vpop.f32.mrb[0].mxu0
    %v231 = vadd.f32 %v154, %v230
    %v232 = vpop.f32.mrb[0].mxu0
    %v233 = vpop.f32.mrb[0].mxu0
    %v234 = vadd.f32 %v154, %v233
    %v235 = vpop.f32.mrb[0].mxu0
    %236 = vdwg.mxu0
    %v237 = vld [vmem:[%s6] sm:$0xf]
    %v238 = vld [vmem:[%s6 + $0x4] sm:$0xf]
    %v239 = vld [vmem:[%s6 + $0x8] sm:$0xf]
    %v240 = vld [vmem:[%s6 + $0xc] sm:$0xf]
    %v241 = vld [vmem:[%s6 + $0x10] sm:$0xf]
    %v242 = vld [vmem:[%s6 + $0x14] sm:$0xf]
    %v243 = vld [vmem:[%s6 + $0x18] sm:$0xf]
    %v244 = vld [vmem:[%s6 + $0x1c] sm:$0xf]
    %v245 = vld [vmem:[%s7] sm:$0xf]
    %v246 = vld [vmem:[%s7 + $0x4] sm:$0xf]
    %v247 = vld [vmem:[%s7 + $0x8] sm:$0xf]
    %v248 = vld [vmem:[%s7 + $0xc] sm:$0xf]
    %v249 = vld [vmem:[%s7 + $0x10] sm:$0xf]
    %v250 = vld [vmem:[%s7 + $0x14] sm:$0xf]
    %v251 = vld [vmem:[%s7 + $0x18] sm:$0xf]
    %v252 = vld [vmem:[%s7 + $0x1c] sm:$0xf]
    %v253 = vld [vmem:[%s7 + $0x20] sm:$0xf]
    %v254 = vld [vmem:[%s7 + $0x24] sm:$0xf]
    %v255 = vld [vmem:[%s7 + $0x28] sm:$0xf]
    %v256 = vld [vmem:[%s7 + $0x2c] sm:$0xf]
    %v269 = vunpack.c.l.b16 %v245
    %v270 = vunpack.c.l.b16 %v246
    %v271 = vunpack.c.l.b16 %v247
    %v272 = vunpack.c.l.b16 %v248
    %v273 = vunpack.c.l.b16 %v249
    %v274 = vunpack.c.l.b16 %v250
    %v275 = vunpack.c.l.b16 %v251
    %v276 = vunpack.c.l.b16 %v252
    %v277 = vunpack.c.l.b16 %v253
    %v278 = vunpack.c.l.b16 %v254
    %v279 = vunpack.c.l.b16 %v255
    %v280 = vunpack.c.l.b16 %v256
    %v281 = vpack.c.b16 %v270, %v269
    %v282 = vpack.c.b16 %v272, %v271
    %v283 = vpack.c.b16 %v274, %v273
    %v284 = vpack.c.b16 %v276, %v275
    %v285 = vpack.c.b16 %v278, %v277
    %v286 = vpack.c.b16 %v280, %v279
    %293 = vmatprep.subr.bf16.mxu0 0
    %294 = vmatpush1.bf16.msra.mxu0 %v281
    %295 = vmatprep.subr.bf16.mxu0 0
    %296 = vmatpush1.bf16.msra.mxu0 %v282
    %297 = vmatprep.subr.bf16.mxu0 0
    %298 = vmatpush1.bf16.msra.mxu0 %v283
    %299 = vmatprep.subr.bf16.mxu0 0
    %300 = vmatpush1.bf16.msra.mxu0 %v284
    %301 = vmatprep.subr.bf16.mxu0 0
    %302 = vmatpush1.bf16.msra.mxu0 %v285
    %303 = vmatprep.subr.bf16.mxu0 0
    %304 = vmatpush1.bf16.msra.mxu0 %v286
    %305 = vmatprep.subr.bf16.mxu0 0
    %306 = vmatpush1.bf16.msra.mxu0 0
    %307 = vmatprep.subr.bf16.mxu0 0
    %308 = vmatpush1.bf16.msra.mxu0 0
    %309 = vmatprep.subr.bf16.mxu0 0
    %310 = vmatpush1.bf16.msra.mxu0 0
    %311 = vmatprep.subr.bf16.mxu0 0
    %312 = vmatpush1.bf16.msra.mxu0 0
    %313 = vmatprep.subr.bf16.mxu0 0
    %314 = vmatpush1.bf16.msra.mxu0 0
    %315 = vmatprep.subr.bf16.mxu0 0
    %316 = vmatpush1.bf16.msra.mxu0 0
    %317 = vmatprep.subr.bf16.mxu0 0
    %318 = vmatpush1.bf16.msra.mxu0 0
    %319 = vmatprep.subr.bf16.mxu0 0
    %320 = vmatpush1.bf16.msra.mxu0 0
    %321 = vmatprep.subr.bf16.mxu0 0
    %322 = vmatpush1.bf16.msra.mxu0 0
    %323 = vmatprep.subr.bf16.mxu0 0
    %324 = vmatpush1.bf16.msra.mxu0 0
    %325 = vmatprep.mubr.bf16.mxu0 0
    %326 = vmatmul.mubr.bf16.gmra.mrb[0].mxu0 %v194
    %v327 = vpop.f32.mrb[0].mxu0
    %v328 = vadd.f32 0.0, %v327
    %v329 = vpop.f32.mrb[0].mxu0
    %v330 = vpop.f32.mrb[0].mxu0
    %v331 = vadd.f32 0.0, %v330
    %v332 = vpop.f32.mrb[0].mxu0
    %333 = vdwg.mxu0
    %v342 = vunpack.c.l.b16 %v237
    %v343 = vunpack.c.l.b16 %v238
    %v344 = vunpack.c.l.b16 %v239
    %v345 = vunpack.c.l.b16 %v240
    %v346 = vunpack.c.l.b16 %v241
    %v347 = vunpack.c.l.b16 %v242
    %v348 = vunpack.c.l.b16 %v243
    %v349 = vunpack.c.l.b16 %v244
    %v350 = vpack.c.b16 %v343, %v342
    %v351 = vpack.c.b16 %v345, %v344
    %v352 = vpack.c.b16 %v347, %v346
    %v353 = vpack.c.b16 %v349, %v348
    %358 = vmatprep.subr.bf16.mxu0 0
    %359 = vmatpush1.bf16.msra.mxu0 %v350
    %360 = vmatprep.subr.bf16.mxu0 0
    %361 = vmatpush1.bf16.msra.mxu0 %v351
    %362 = vmatprep.subr.bf16.mxu0 0
    %363 = vmatpush1.bf16.msra.mxu0 %v352
    %364 = vmatprep.subr.bf16.mxu0 0
    %365 = vmatpush1.bf16.msra.mxu0 %v353
    %366 = vmatprep.subr.bf16.mxu0 0
    %367 = vmatpush1.bf16.msra.mxu0 0
    %368 = vmatprep.subr.bf16.mxu0 0
    %369 = vmatpush1.bf16.msra.mxu0 0
    %370 = vmatprep.subr.bf16.mxu0 0
    %371 = vmatpush1.bf16.msra.mxu0 0
    %372 = vmatprep.subr.bf16.mxu0 0
    %373 = vmatpush1.bf16.msra.mxu0 0
    %374 = vmatprep.subr.bf16.mxu0 0
    %375 = vmatpush1.bf16.msra.mxu0 0
    %376 = vmatprep.subr.bf16.mxu0 0
    %377 = vmatpush1.bf16.msra.mxu0 0
    %378 = vmatprep.subr.bf16.mxu0 0
    %379 = vmatpush1.bf16.msra.mxu0 0
    %380 = vmatprep.subr.bf16.mxu0 0
    %381 = vmatpush1.bf16.msra.mxu0 0
    %382 = vmatprep.subr.bf16.mxu0 0
    %383 = vmatpush1.bf16.msra.mxu0 0
    %384 = vmatprep.subr.bf16.mxu0 0
    %385 = vmatpush1.bf16.msra.mxu0 0
    %386 = vmatprep.subr.bf16.mxu0 0
    %387 = vmatpush1.bf16.msra.mxu0 0
    %388 = vmatprep.subr.bf16.mxu0 0
    %389 = vmatpush1.bf16.msra.mxu0 0
    %390 = vmatprep.mubr.bf16.mxu0 0
    %391 = vmatmul.mubr.bf16.gmra.mrb[0].mxu0 %v94
    %v392 = vpop.f32.mrb[0].mxu0
    %v393 = vadd.f32 %v328, %v392
    %v394 = vpop.f32.mrb[0].mxu0
    %v395 = vpop.f32.mrb[0].mxu0
    %v396 = vadd.f32 %v331, %v395
    %v397 = vpop.f32.mrb[0].mxu0
    %398 = vdwg.mxu0
    %v399 = vld [vmem:[%s8] sm:$0x1]
    %v401 = vlaneseq
    %v402 = vshrl.u32 %v401, 7
    %v403 = vsub.s32 0, %v402
    %v404 = vrot.slane %v399, %v403
    %v406 = vadd.f32 %v393, %v404
    %v407 = vadd.f32 %v396, %v404
    %v408 = vxor.u32 %v406, 2147483648
    %v409 = vxor.u32 %v407, 2147483648
    %v410 = vmul.f32 %v408, 1.442695
    %v411 = vpow.pop %v410
    %v412 = vmul.f32 %v409, 1.442695
    %v413 = vpow.pop %v412
    %v414 = vadd.f32 %v411, 1.0
    %v415 = vadd.f32 %v413, 1.0
    %v416 = vrcp.pop %v414
    %v417 = vmul.f32 1.0, %v416
    %v418 = vrcp.pop %v415
    %v419 = vmul.f32 1.0, %v418
    %v420 = vsub.f32 %v231, %v131
    %v421 = vsub.f32 %v234, %v134
    %v422 = vmul.f32 %v417, %v420
    %v423 = vmul.f32 %v419, %v421
    %v424 = vadd.f32 %v131, %v422
    %v425 = vadd.f32 %v134, %v423
    %v426 = vxor.u32 %v424, 2147483648
    %v427 = vxor.u32 %v425, 2147483648
    %v428 = vmul.f32 %v426, 1.442695
    %v429 = vpow.pop %v428
    %v430 = vmul.f32 %v427, 1.442695
    %v431 = vpow.pop %v430
    %v432 = vadd.f32 %v429, 1.0
    %v433 = vadd.f32 %v431, 1.0
    %v434 = vrcp.pop %v432
    %v435 = vmul.f32 1.0, %v434
    %v436 = vrcp.pop %v433
    %v437 = vmul.f32 1.0, %v436
    %v438 = vmul.f32 %v424, %v435
    %v439 = vmul.f32 %v425, %v437
    %v440 = vld [vmem:[#allocation2] sm:$0xff]
    %v441 = vld [vmem:[#allocation2 + $0x8] sm:$0xff]
    %v442 = vpack.c.bf16 %v439, %v438
    %v443 = vld [vmem:[%s9] sm:$0xf]
    %v444 = vld [vmem:[%s9 + $0x4] sm:$0xf]
    %v445 = vld [vmem:[%s9 + $0x8] sm:$0xf]
    %v446 = vld [vmem:[%s9 + $0xc] sm:$0xf]
    %v451 = vunpack.c.l.b16 %v443
    %v452 = vunpack.c.l.b16 %v444
    %v453 = vunpack.c.l.b16 %v445
    %v454 = vunpack.c.l.b16 %v446
    %v455 = vpack.c.b16 %v452, %v451
    %v456 = vpack.c.b16 %v454, %v453
    %vm459 = vcmask 261120
    %v461 = vsel %vm459, %v442, 0
    %463 = vmatprep.subr.bf16.mxu0 0
    %464 = vmatpush1.bf16.msra.mxu0 %v455
    %465 = vmatprep.subr.bf16.mxu0 0
    %466 = vmatpush1.bf16.msra.mxu0 %v456
    %467 = vmatprep.subr.bf16.mxu0 0
    %468 = vmatpush1.bf16.msra.mxu0 0
    %469 = vmatprep.subr.bf16.mxu0 0
    %470 = vmatpush1.bf16.msra.mxu0 0
    %471 = vmatprep.subr.bf16.mxu0 0
    %472 = vmatpush1.bf16.msra.mxu0 0
    %473 = vmatprep.subr.bf16.mxu0 0
    %474 = vmatpush1.bf16.msra.mxu0 0
    %475 = vmatprep.subr.bf16.mxu0 0
    %476 = vmatpush1.bf16.msra.mxu0 0
    %477 = vmatprep.subr.bf16.mxu0 0
    %478 = vmatpush1.bf16.msra.mxu0 0
    %479 = vmatprep.subr.bf16.mxu0 0
    %480 = vmatpush1.bf16.msra.mxu0 0
    %481 = vmatprep.subr.bf16.mxu0 0
    %482 = vmatpush1.bf16.msra.mxu0 0
    %483 = vmatprep.subr.bf16.mxu0 0
    %484 = vmatpush1.bf16.msra.mxu0 0
    %485 = vmatprep.subr.bf16.mxu0 0
    %486 = vmatpush1.bf16.msra.mxu0 0
    %487 = vmatprep.subr.bf16.mxu0 0
    %488 = vmatpush1.bf16.msra.mxu0 0
    %489 = vmatprep.subr.bf16.mxu0 0
    %490 = vmatpush1.bf16.msra.mxu0 0
    %491 = vmatprep.subr.bf16.mxu0 0
    %492 = vmatpush1.bf16.msra.mxu0 0
    %493 = vmatprep.subr.bf16.mxu0 0
    %494 = vmatpush1.bf16.msra.mxu0 0
    %495 = vmatprep.mubr.bf16.mxu0 0
    %496 = vmatmul.mubr.bf16.gmra.mrb[0].mxu0 %v461
    %v497 = vpop.f32.mrb[0].mxu0
    %v498 = vadd.f32 0.0, %v497
    %v499 = vpop.f32.mrb[0].mxu0
    %v500 = vpop.f32.mrb[0].mxu0
    %v501 = vadd.f32 0.0, %v500
    %v502 = vpop.f32.mrb[0].mxu0
    %503 = vdwg.mxu0
    %v504 = vadd.f32 %v440, %v498
    %v505 = vadd.f32 %v441, %v501
    %506 = vst.msk [vmem:[#allocation2] sm:$0xff] %vm459, %v504
    %507 = vst.msk [vmem:[#allocation2 + $0x8] sm:$0xff] %vm459, %v505
    // Predicated region
    $region50: #{tpu_custom_call.1} parent=1 // pred_check
      %p508 = pneg %p40
    $region51: #{tpu_custom_call.1} parent=1 // pred_check_branch
      %510 = sbr.rel (%p508) target = $region53
    $region52: #{tpu_custom_call.1} parent=1 // pred_region
      %v511 = vld [vmem:[#allocation2] sm:$0xff]
      %v512 = vld [vmem:[#allocation2 + $0x8] sm:$0xff]
      %v513 = vld [vmem:[%s10] sm:$0x1]
      %v515 = vlaneseq
      %v516 = vshrl.u32 %v515, 7
      %v517 = vsub.s32 0, %v516
      %v518 = vrot.slane %v513, %v517
      %v520 = vadd.f32 %v511, %v518
      %v521 = vadd.f32 %v512, %v518
      %v522 = vpack.c.bf16 %v521, %v520
      %v524 = vunpack.c.l.b16 %v522
      %v525 = vunpack.c.h.b16 %v522
      %v526 = vpack.c.b16 %v524, %v524
      %v527 = vpack.c.b16 %v525, %v525
      %vm530 = vcmask 257024
      %531 = vst.msk [vmem:[#allocation3] sm:$0xf] %vm530, %v526
      %532 = vst.msk [vmem:[#allocation3 + $0x4] sm:$0xf] %vm530, %v527
    $region53: #{tpu_custom_call.1} parent=1 // pred_fallthru
      _
    // Predicated region
    $region54: #{tpu_custom_call.1} parent=1 // pred_check
      _
    $region55: #{tpu_custom_call.1} parent=1 // pred_check_branch
      %534 = sbr.rel (0) target = $region57
    $region56: #{tpu_custom_call.1} parent=1 // pred_region
      %s536 = ssub.s32 128, 128
      %537 = vsyncadd [#allocation4], %s536
      %s538 = sshll.u32 [#allocation3], 4
      %s539 = int_to_ptr.vmem [resolvable:$true] %s538
      %544 = dma.vmem_to_hbm [thread:$0]  %s539, 128, %s11, [#allocation4], 64, 64, 4
    $region57: #{tpu_custom_call.1} parent=1 // pred_fallthru
      _
    // Predicated region
    $region58: #{tpu_custom_call.1} parent=1 // pred_check
      _
    $region59: #{tpu_custom_call.1} parent=1 // pred_check_branch
      %546 = sbr.rel (0) target = $region61
    $region60: #{tpu_custom_call.1} parent=1 // pred_region
      %547 = dma.done [#allocation4], 128
    $region61: #{tpu_custom_call.1} parent=1 // pred_fallthru
      _
    %548 = vsyncpa [#allocation4], 1

</llo_original>
